<compile_context>
chip_gen: v7x
topology: tpu7x:2x2x1
jax: 0.10.0
libtpu: 0.0.40
codegen_flags: <defaults>
</compile_context>

<pallas_src>
import functools

import jax
import jax.numpy as jnp
from jax.experimental import pallas as pl
from jax.experimental.pallas import tpu as pltpu


# ---------------------------------------------------------------------------
# True PyTorch widths and hardware granularities.
H1, H2, H3 = 312, 156, 1
LANE = 128
SUBLANE = 8


def _round_up(n, m):
    return ((n + m - 1) // m) * m


# ---------------------------------------------------------------------------
# Kernel: one batch tile (tb columns) through the whole 3-layer MLP, transposed.
#   x_ref : (d_in_pad, tb) bf16      activations^T, batch on lanes
#   wN    : (outN_pad, inN_pad) bf16 transposed weights
#   bN    : (outN_pad, 1) f32        bias columns (broadcast across lanes)
#   o_ref : (1, tb) f32              real layer-3 output row, lane-dense
def mlp_kernel(x_ref, w1_ref, b1_ref, w2_ref, b2_ref, w3_ref, b3_ref, o_ref):
    # Layer 1: bf16 operands into the MXU, f32 accumulate, f32 bias/ReLU.
    a1 = jnp.dot(w1_ref[...], x_ref[...],
                 preferred_element_type=jnp.float32)            # (384, tb)
    a1 = jnp.maximum(a1 + b1_ref[...], 0.0)

    # Layer 2.
    a2 = jnp.dot(w2_ref[...], a1.astype(jnp.bfloat16),
                 preferred_element_type=jnp.float32)            # (256, tb)
    a2 = jnp.maximum(a2 + b2_ref[...], 0.0)

    # Layer 3 (true width 1, padded to 128 sublanes; only row 0 is real).
    # On v5e this padded dot is ~10-14% of MXU work and could be replaced by a
    # VPU multiply + sublane reduction; on v6e/v7x the MXU has slack so the dot
    # is kept as the portable path.
    a3 = jnp.dot(w3_ref[...], a2.astype(jnp.bfloat16),
                 preferred_element_type=jnp.float32)            # (128, tb)
    a3 = jnp.maximum(a3 + b3_ref[...], 0.0)

    # Emit only the real output row -> lane-dense, unmasked (1, tb) store.
    o_ref[...] = a3[0:1, :].astype(o_ref.dtype)


# ---------------------------------------------------------------------------
# Batch tiling: batch rides the lane axis, so tiles are multiples of 128.
def _choose_batch_tiling(batch, max_batch_tile):
    b_pad = _round_up(max(batch, 1), LANE)
    max_tile = _round_up(max(max_batch_tile, LANE), LANE)
    # >= 2 grid steps whenever the batch allows it so v7x's two TensorCores both
    # get work on the "parallel" batch axis (no-op on single-TC v5e/v6e).
    min_tiles = 2 if b_pad >= 2 * LANE else 1
    n_tiles = max(pl.cdiv(b_pad, max_tile), min_tiles)
    tb = _round_up(pl.cdiv(b_pad, n_tiles), LANE)
    n_tiles = pl.cdiv(b_pad, tb)
    b_pad = n_tiles * tb
    return tb, b_pad, n_tiles


# ---------------------------------------------------------------------------
# Wrapper.
def simple_ann_forward(x, packed_params, *, max_batch_tile=2048):
    """x: (B, seq, input_size) float32. Returns (B, 1) float32."""
    w1, b1, w2, b2, w3, b3 = packed_params
    B = x.shape[0]
    d_in_pad = w1.shape[1]          # padded fan_in of layer 1

    # flatten (matches torch.flatten(x, start_dim=1)), cast to bf16 once in the
    # wrapper, transpose so batch is on lanes, zero-pad features and batch.
    x_flat = x.reshape(B, -1)
    d_in = x_flat.shape[1]

    tb, b_pad, n_tiles = _choose_batch_tiling(B, max_batch_tile)

    x_t = x_flat.astype(jnp.bfloat16).T                         # (d_in, B)
    x_t = jnp.pad(x_t, ((0, d_in_pad - d_in), (0, b_pad - B)))  # (d_in_pad, b_pad)

    h1p, h2p, h3p = w1.shape[0], w2.shape[0], w3.shape[0]
    flops = 2 * b_pad * (d_in_pad * h1p + h1p * h2p + h2p * h3p)
    bytes_accessed = (
        b_pad * (d_in_pad * 2 + 4)                                   # input + output
        + 2 * (w1.size + w2.size + w3.size)                          # bf16 weights
        + 4 * (b1.size + b2.size + b3.size))                         # f32 biases

    out = pl.pallas_call(
        mlp_kernel,
        out_shape=jax.ShapeDtypeStruct((1, b_pad), jnp.float32),
        grid=(n_tiles,),
        in_specs=[
            # streamed (transposed) input tile
            pl.BlockSpec((d_in_pad, tb), lambda i: (0, i)),
            # weights / biases: full arrays, same block every step -> VMEM-resident
            pl.BlockSpec(w1.shape, lambda i: (0, 0)),
            pl.BlockSpec(b1.shape, lambda i: (0, 0)),
            pl.BlockSpec(w2.shape, lambda i: (0, 0)),
            pl.BlockSpec(b2.shape, lambda i: (0, 0)),
            pl.BlockSpec(w3.shape, lambda i: (0, 0)),
            pl.BlockSpec(b3.shape, lambda i: (0, 0)),
        ],
        out_specs=pl.BlockSpec((1, tb), lambda i: (0, i)),
        compiler_params=pltpu.CompilerParams(
            dimension_semantics=("parallel",),
        ),
        cost_estimate=pl.CostEstimate(
            flops=flops, transcendentals=0, bytes_accessed=bytes_accessed),
    )(x_t, w1, b1, w2, b2, w3, b3)

    # Strip batch padding; real output is row 0 -> (B, 1).
    return out[0, :B].reshape(B, 1)


# ---------------------------------------------------------------------------
# Parameter init (mimics nn.Linear default U[-1/sqrt(fan_in), 1/sqrt(fan_in)]),
# kept in unpadded (in, out) f32 for the reference path.
def init_params(key, in_features):
    dims = [(in_features, H1), (H1, H2), (H2, H3)]
    params = []
    for fan_in, fan_out in dims:
        key, kw, kb = jax.random.split(key, 3)
        bound = 1.0 / jnp.sqrt(fan_in)
        w = jax.random.uniform(kw, (fan_in, fan_out), jnp.float32, -bound, bound)
        b = jax.random.uniform(kb, (fan_out,), jnp.float32, -bound, bound)
        params.append((w, b))
    return params


def pack_params(params_f32):
    """Transpose every layer to (out, in), zero-pad to lane multiples of 128 and
    cast weights to bf16.  Padded rows/cols and bias entries are exactly zero, so
    padded feature lanes stay exactly zero through bias + ReLU."""
    packed = []
    for w, b in params_f32:                       # w: (fan_in, fan_out)
        fi, fo = w.shape
        fi_p, fo_p = _round_up(fi, LANE), _round_up(fo, LANE)
        wt = jnp.zeros((fo_p, fi_p), jnp.float32).at[:fo, :fi].set(w.T)
        bp = jnp.zeros((fo_p, 1), jnp.float32).at[:fo, 0].set(b)
        packed += [wt.astype(jnp.bfloat16), bp]
    return tuple(packed)


def reference_forward(x, params_f32):
    """Pure-JAX f32 reference."""
    (w1, b1), (w2, b2), (w3, b3) = params_f32
    h = x.reshape(x.shape[0], -1)
    h = jnp.maximum(h @ w1 + b1, 0.0)
    h = jnp.maximum(h @ w2 + b2, 0.0)
    h = jnp.maximum(h @ w3 + b3, 0.0)
    return h


# ---------------------------------------------------------------------------
if __name__ == "__main__":
    key = jax.random.PRNGKey(0)
    sequence_size, input_size = 8, 32      # in_features = 256
    batch = 4                              # batch padded to one 128-lane tile

    k_x, k_p = jax.random.split(key)
    x = jax.random.normal(k_x, (batch, sequence_size, input_size), jnp.float32)

    params_f32 = init_params(k_p, sequence_size * input_size)
    packed = pack_params(params_f32)

    fwd = jax.jit(functools.partial(simple_ann_forward, max_batch_tile=2048))
    out = jax.block_until_ready(fwd(x, packed))

    ref = reference_forward(x, params_f32)
    assert out.shape == (batch, 1), out.shape
    # bf16 MXU operands with f32 accumulate: relaxed tolerance vs the f32 reference.
    # For bit-closer parity, keep weights/activations f32 (trades against the
    # bf16-input bandwidth optimization).
    assert jnp.allclose(out, ref, atol=5e-2, rtol=5e-2), (
        f"mismatch vs reference: max abs err {jnp.max(jnp.abs(out - ref))}")

    print("KERNEL_OK")
</pallas_src>

<mosaic_0001>
module attributes {stable_mosaic.version = 11 : i64} {
  func.func @mlp_kernel(%arg0: i32, %arg1: memref<256x128xbf16, #tpu.memory_space<vmem>>, %arg2: memref<384x256xbf16, #tpu.memory_space<vmem>>, %arg3: memref<384x1xf32, #tpu.memory_space<vmem>>, %arg4: memref<256x384xbf16, #tpu.memory_space<vmem>>, %arg5: memref<256x1xf32, #tpu.memory_space<vmem>>, %arg6: memref<128x256xbf16, #tpu.memory_space<vmem>>, %arg7: memref<128x1xf32, #tpu.memory_space<vmem>>, %arg8: memref<1x128xf32, #tpu.memory_space<vmem>>) attributes {dimension_semantics = [#tpu.dimension_semantics<parallel>], iteration_bounds = array<i64: 1>, scalar_prefetch = 0 : i64, scratch_operands = 0 : i64, tpu.core_type = #tpu.core_type<tc>, window_params = [{transform_indices = @transform_0, window_bounds = array<i64: 256, 128>}, {pipeline_mode = #tpu.pipeline_mode<synchronous>, transform_indices = @transform_1, window_bounds = array<i64: 384, 256>}, {pipeline_mode = #tpu.pipeline_mode<synchronous>, transform_indices = @transform_2, window_bounds = array<i64: 384, 1>}, {pipeline_mode = #tpu.pipeline_mode<synchronous>, transform_indices = @transform_3, window_bounds = array<i64: 256, 384>}, {pipeline_mode = #tpu.pipeline_mode<synchronous>, transform_indices = @transform_4, window_bounds = array<i64: 256, 1>}, {pipeline_mode = #tpu.pipeline_mode<synchronous>, transform_indices = @transform_5, window_bounds = array<i64: 128, 256>}, {pipeline_mode = #tpu.pipeline_mode<synchronous>, transform_indices = @transform_6, window_bounds = array<i64: 128, 1>}, {transform_indices = @transform_7, window_bounds = array<i64: 1, 128>}]} {
    %c0 = arith.constant 0 : index
    %c0_0 = arith.constant 0 : index
    %0 = vector.load %arg2[%c0, %c0_0] : memref<384x256xbf16, #tpu.memory_space<vmem>>, vector<384x256xbf16>
    %c0_1 = arith.constant 0 : index
    %c0_2 = arith.constant 0 : index
    %1 = vector.load %arg1[%c0_1, %c0_2] : memref<256x128xbf16, #tpu.memory_space<vmem>>, vector<256x128xbf16>
    %cst = arith.constant dense<0.000000e+00> : vector<384x128xf32>
    %2 = tpu.matmul %0, %1, %cst {dimension_numbers = #tpu.dot_dimension_numbers<[1], [0], [0], [1], [0, 0, 1, 1], [], []>} : vector<384x256xbf16>, vector<256x128xbf16>, vector<384x128xf32> -> vector<384x128xf32>
    %c0_3 = arith.constant 0 : index
    %c0_4 = arith.constant 0 : index
    %3 = vector.load %arg3[%c0_3, %c0_4] : memref<384x1xf32, #tpu.memory_space<vmem>>, vector<384x1xf32>
    %4 = vector.broadcast %3 : vector<384x1xf32> to vector<384x128xf32>
    %5 = arith.addf %2, %4 : vector<384x128xf32>
    %cst_5 = arith.constant 0.000000e+00 : f32
    %6 = vector.broadcast %cst_5 : f32 to vector<384x128xf32>
    %7 = arith.maximumf %5, %6 : vector<384x128xf32>
    %c0_6 = arith.constant 0 : index
    %c0_7 = arith.constant 0 : index
    %8 = vector.load %arg4[%c0_6, %c0_7] : memref<256x384xbf16, #tpu.memory_space<vmem>>, vector<256x384xbf16>
    %9 = arith.truncf %7 : vector<384x128xf32> to vector<384x128xbf16>
    %cst_8 = arith.constant dense<0.000000e+00> : vector<256x128xf32>
    %10 = tpu.matmul %8, %9, %cst_8 {dimension_numbers = #tpu.dot_dimension_numbers<[1], [0], [0], [1], [0, 0, 1, 1], [], []>} : vector<256x384xbf16>, vector<384x128xbf16>, vector<256x128xf32> -> vector<256x128xf32>
    %c0_9 = arith.constant 0 : index
    %c0_10 = arith.constant 0 : index
    %11 = vector.load %arg5[%c0_9, %c0_10] : memref<256x1xf32, #tpu.memory_space<vmem>>, vector<256x1xf32>
    %12 = vector.broadcast %11 : vector<256x1xf32> to vector<256x128xf32>
    %13 = arith.addf %10, %12 : vector<256x128xf32>
    %cst_11 = arith.constant 0.000000e+00 : f32
    %14 = vector.broadcast %cst_11 : f32 to vector<256x128xf32>
    %15 = arith.maximumf %13, %14 : vector<256x128xf32>
    %c0_12 = arith.constant 0 : index
    %c0_13 = arith.constant 0 : index
    %16 = vector.load %arg6[%c0_12, %c0_13] : memref<128x256xbf16, #tpu.memory_space<vmem>>, vector<128x256xbf16>
    %17 = arith.truncf %15 : vector<256x128xf32> to vector<256x128xbf16>
    %cst_14 = arith.constant dense<0.000000e+00> : vector<128x128xf32>
    %18 = tpu.matmul %16, %17, %cst_14 {dimension_numbers = #tpu.dot_dimension_numbers<[1], [0], [0], [1], [0, 0, 1, 1], [], []>} : vector<128x256xbf16>, vector<256x128xbf16>, vector<128x128xf32> -> vector<128x128xf32>
    %c0_15 = arith.constant 0 : index
    %c0_16 = arith.constant 0 : index
    %19 = vector.load %arg7[%c0_15, %c0_16] : memref<128x1xf32, #tpu.memory_space<vmem>>, vector<128x1xf32>
    %20 = vector.broadcast %19 : vector<128x1xf32> to vector<128x128xf32>
    %21 = arith.addf %18, %20 : vector<128x128xf32>
    %cst_17 = arith.constant 0.000000e+00 : f32
    %22 = vector.broadcast %cst_17 : f32 to vector<128x128xf32>
    %23 = arith.maximumf %21, %22 : vector<128x128xf32>
    %24 = vector.extract_strided_slice %23 {offsets = [0, 0], sizes = [1, 128], strides = [1, 1]} : vector<128x128xf32> to vector<1x128xf32>
    %c0_18 = arith.constant 0 : index
    %c0_19 = arith.constant 0 : index
    %25 = vector.load %arg8[%c0_18, %c0_19] : memref<1x128xf32, #tpu.memory_space<vmem>>, vector<1x128xf32>
    tpu.vector_store %arg8[%c0_18, %c0_19], %24 {strides = array<i32>} : memref<1x128xf32, #tpu.memory_space<vmem>>, vector<1x128xf32>,
    return
  }
  func.func @transform_0(%arg0: i32) -> (i32, i32) {
    %c0_i32 = arith.constant 0 : i32
    %c0_i32_0 = arith.constant 0 : i32
    return %c0_i32, %arg0 : i32, i32
  }
  func.func @transform_1(%arg0: i32) -> (i32, i32) {
    %c0_i32 = arith.constant 0 : i32
    %c0_i32_0 = arith.constant 0 : i32
    %c0_i32_1 = arith.constant 0 : i32
    return %c0_i32, %c0_i32_0 : i32, i32
  }
  func.func @transform_2(%arg0: i32) -> (i32, i32) {
    %c0_i32 = arith.constant 0 : i32
    %c0_i32_0 = arith.constant 0 : i32
    %c0_i32_1 = arith.constant 0 : i32
    return %c0_i32, %c0_i32_0 : i32, i32
  }
  func.func @transform_3(%arg0: i32) -> (i32, i32) {
    %c0_i32 = arith.constant 0 : i32
    %c0_i32_0 = arith.constant 0 : i32
    %c0_i32_1 = arith.constant 0 : i32
    return %c0_i32, %c0_i32_0 : i32, i32
  }
  func.func @transform_4(%arg0: i32) -> (i32, i32) {
    %c0_i32 = arith.constant 0 : i32
    %c0_i32_0 = arith.constant 0 : i32
    %c0_i32_1 = arith.constant 0 : i32
    return %c0_i32, %c0_i32_0 : i32, i32
  }
  func.func @transform_5(%arg0: i32) -> (i32, i32) {
    %c0_i32 = arith.constant 0 : i32
    %c0_i32_0 = arith.constant 0 : i32
    %c0_i32_1 = arith.constant 0 : i32
    return %c0_i32, %c0_i32_0 : i32, i32
  }
  func.func @transform_6(%arg0: i32) -> (i32, i32) {
    %c0_i32 = arith.constant 0 : i32
    %c0_i32_0 = arith.constant 0 : i32
    %c0_i32_1 = arith.constant 0 : i32
    return %c0_i32, %c0_i32_0 : i32, i32
  }
  func.func @transform_7(%arg0: i32) -> (i32, i32) {
    %c0_i32 = arith.constant 0 : i32
    %c0_i32_0 = arith.constant 0 : i32
    return %c0_i32, %arg0 : i32, i32
  }
}

</mosaic_0001>

<llo_original>
// kernel: simple_ann_forward.1
$region0: #{simple_ann_forward.1}
  #allocation0 [shape = 'u32[]', space=smem, size = 0x4, offset = 0x4, fixed_abs, tag = 'smem constant byte address 0x4 - core index']
  #allocation1 [shape = 'u32[144,128]{1,0:T(1,128)}', space=vmem, size = 0x12000, scoped, tag = 'internal scratch']
  %s0 = inlined_call_operand.vmem [shape: bf16[256,128], index: 0, kind: input, shape index: {}]
  %s1 = inlined_call_operand.vmem [shape: bf16[384,256], index: 1, kind: input, shape index: {}]
  %s2 = inlined_call_operand.vmem [shape: f32[384,1], index: 2, kind: input, shape index: {}]
  %s3 = inlined_call_operand.vmem [shape: bf16[256,384], index: 3, kind: input, shape index: {}]
  %s4 = inlined_call_operand.vmem [shape: f32[256,1], index: 4, kind: input, shape index: {}]
  %s5 = inlined_call_operand.vmem [shape: bf16[128,256], index: 5, kind: input, shape index: {}]
  %s6 = inlined_call_operand.vmem [shape: f32[128,1], index: 6, kind: input, shape index: {}]
  %s7 = inlined_call_operand.vmem [shape: f32[1,128], index: 7, kind: output, shape index: {}]
  %s8 = sld [smem:[#allocation0]]
  $region38: #{simple_ann_forward.1} parent=0
    _
  %s10 = ssub.s32 1, %s8
  %s11 = scalar_select 0, %s10, %s8
  // Predicated region
  $region2: #{simple_ann_forward.1} parent=0 // pred_check
    _
  $region3: #{simple_ann_forward.1} parent=0 // pred_check_branch
    %13 = sbr.rel (0) target = $region5
  $region4: #{simple_ann_forward.1} parent=0 // pred_region
    _
  $region5: #{simple_ann_forward.1} parent=0 // pred_fallthru
    _
  // Predicated region
  $region6: #{simple_ann_forward.1} parent=0 // pred_check
    _
  $region7: #{simple_ann_forward.1} parent=0 // pred_check_branch
    %15 = sbr.rel (0) target = $region9
  $region8: #{simple_ann_forward.1} parent=0 // pred_region
    _
  $region9: #{simple_ann_forward.1} parent=0 // pred_fallthru
    _
  // Predicated region
  $region10: #{simple_ann_forward.1} parent=0 // pred_check
    _
  $region11: #{simple_ann_forward.1} parent=0 // pred_check_branch
    %17 = sbr.rel (0) target = $region13
  $region12: #{simple_ann_forward.1} parent=0 // pred_region
    _
  $region13: #{simple_ann_forward.1} parent=0 // pred_fallthru
    _
  // Predicated region
  $region14: #{simple_ann_forward.1} parent=0 // pred_check
    _
  $region15: #{simple_ann_forward.1} parent=0 // pred_check_branch
    %19 = sbr.rel (0) target = $region17
  $region16: #{simple_ann_forward.1} parent=0 // pred_region
    _
  $region17: #{simple_ann_forward.1} parent=0 // pred_fallthru
    _
  // Predicated region
  $region18: #{simple_ann_forward.1} parent=0 // pred_check
    _
  $region19: #{simple_ann_forward.1} parent=0 // pred_check_branch
    %21 = sbr.rel (0) target = $region21
  $region20: #{simple_ann_forward.1} parent=0 // pred_region
    _
  $region21: #{simple_ann_forward.1} parent=0 // pred_fallthru
    _
  // Predicated region
  $region22: #{simple_ann_forward.1} parent=0 // pred_check
    _
  $region23: #{simple_ann_forward.1} parent=0 // pred_check_branch
    %23 = sbr.rel (0) target = $region25
  $region24: #{simple_ann_forward.1} parent=0 // pred_region
    _
  $region25: #{simple_ann_forward.1} parent=0 // pred_fallthru
    _
  // Predicated region
  $region26: #{simple_ann_forward.1} parent=0 // pred_check
    _
  $region27: #{simple_ann_forward.1} parent=0 // pred_check_branch
    %25 = sbr.rel (0) target = $region29
  $region28: #{simple_ann_forward.1} parent=0 // pred_region
    _
  $region29: #{simple_ann_forward.1} parent=0 // pred_fallthru
    _
  %v27 = vld [vmem:[%s1] sm:$0xff]
  %v28 = vld [vmem:[%s1 + $0x8] sm:$0xff]
  %v29 = vld [vmem:[%s1 + $0x10] sm:$0xff]
  %v30 = vld [vmem:[%s1 + $0x18] sm:$0xff]
  %v31 = vld [vmem:[%s1 + $0x20] sm:$0xff]
  %v32 = vld [vmem:[%s1 + $0x28] sm:$0xff]
  %v33 = vld [vmem:[%s1 + $0x30] sm:$0xff]
  %v34 = vld [vmem:[%s1 + $0x38] sm:$0xff]
  %v35 = vld [vmem:[%s1 + $0x40] sm:$0xff]
  %v36 = vld [vmem:[%s1 + $0x48] sm:$0xff]
  %v37 = vld [vmem:[%s1 + $0x50] sm:$0xff]
  %v38 = vld [vmem:[%s1 + $0x58] sm:$0xff]
  %v39 = vld [vmem:[%s1 + $0x60] sm:$0xff]
  %v40 = vld [vmem:[%s1 + $0x68] sm:$0xff]
  %v41 = vld [vmem:[%s1 + $0x70] sm:$0xff]
  %v42 = vld [vmem:[%s1 + $0x78] sm:$0xff]
  %v43 = vld [vmem:[%s1 + $0x80] sm:$0xff]
  %v44 = vld [vmem:[%s1 + $0x88] sm:$0xff]
  %v45 = vld [vmem:[%s1 + $0x90] sm:$0xff]
  %v46 = vld [vmem:[%s1 + $0x98] sm:$0xff]
  %v47 = vld [vmem:[%s1 + $0xa0] sm:$0xff]
  %v48 = vld [vmem:[%s1 + $0xa8] sm:$0xff]
  %v49 = vld [vmem:[%s1 + $0xb0] sm:$0xff]
  %v50 = vld [vmem:[%s1 + $0xb8] sm:$0xff]
  %v51 = vld [vmem:[%s1 + $0xc0] sm:$0xff]
  %v52 = vld [vmem:[%s1 + $0xc8] sm:$0xff]
  %v53 = vld [vmem:[%s1 + $0xd0] sm:$0xff]
  %v54 = vld [vmem:[%s1 + $0xd8] sm:$0xff]
  %v55 = vld [vmem:[%s1 + $0xe0] sm:$0xff]
  %v56 = vld [vmem:[%s1 + $0xe8] sm:$0xff]
  %v57 = vld [vmem:[%s1 + $0xf0] sm:$0xff]
  %v58 = vld [vmem:[%s1 + $0xf8] sm:$0xff]
  %v59 = vld [vmem:[%s1 + $0x100] sm:$0xff]
  %v60 = vld [vmem:[%s1 + $0x108] sm:$0xff]
  %v61 = vld [vmem:[%s1 + $0x110] sm:$0xff]
  %v62 = vld [vmem:[%s1 + $0x118] sm:$0xff]
  %v63 = vld [vmem:[%s1 + $0x120] sm:$0xff]
  %v64 = vld [vmem:[%s1 + $0x128] sm:$0xff]
  %v65 = vld [vmem:[%s1 + $0x130] sm:$0xff]
  %v66 = vld [vmem:[%s1 + $0x138] sm:$0xff]
  %v67 = vld [vmem:[%s1 + $0x140] sm:$0xff]
  %v68 = vld [vmem:[%s1 + $0x148] sm:$0xff]
  %v69 = vld [vmem:[%s1 + $0x150] sm:$0xff]
  %v70 = vld [vmem:[%s1 + $0x158] sm:$0xff]
  %v71 = vld [vmem:[%s1 + $0x160] sm:$0xff]
  %v72 = vld [vmem:[%s1 + $0x168] sm:$0xff]
  %v73 = vld [vmem:[%s1 + $0x170] sm:$0xff]
  %v74 = vld [vmem:[%s1 + $0x178] sm:$0xff]
  %v75 = vld [vmem:[%s0] sm:$0xf]
  %v76 = vld [vmem:[%s0 + $0x4] sm:$0xf]
  %v77 = vld [vmem:[%s0 + $0x8] sm:$0xf]
  %v78 = vld [vmem:[%s0 + $0xc] sm:$0xf]
  %v79 = vld [vmem:[%s0 + $0x10] sm:$0xf]
  %v80 = vld [vmem:[%s0 + $0x14] sm:$0xf]
  %v81 = vld [vmem:[%s0 + $0x18] sm:$0xf]
  %v82 = vld [vmem:[%s0 + $0x1c] sm:$0xf]
  %v83 = vld [vmem:[%s0 + $0x20] sm:$0xf]
  %v84 = vld [vmem:[%s0 + $0x24] sm:$0xf]
  %v85 = vld [vmem:[%s0 + $0x28] sm:$0xf]
  %v86 = vld [vmem:[%s0 + $0x2c] sm:$0xf]
  %v87 = vld [vmem:[%s0 + $0x30] sm:$0xf]
  %v88 = vld [vmem:[%s0 + $0x34] sm:$0xf]
  %v89 = vld [vmem:[%s0 + $0x38] sm:$0xf]
  %v90 = vld [vmem:[%s0 + $0x3c] sm:$0xf]
  %v91 = vld [vmem:[%s0 + $0x40] sm:$0xf]
  %v92 = vld [vmem:[%s0 + $0x44] sm:$0xf]
  %v93 = vld [vmem:[%s0 + $0x48] sm:$0xf]
  %v94 = vld [vmem:[%s0 + $0x4c] sm:$0xf]
  %v95 = vld [vmem:[%s0 + $0x50] sm:$0xf]
  %v96 = vld [vmem:[%s0 + $0x54] sm:$0xf]
  %v97 = vld [vmem:[%s0 + $0x58] sm:$0xf]
  %v98 = vld [vmem:[%s0 + $0x5c] sm:$0xf]
  %v99 = vld [vmem:[%s0 + $0x60] sm:$0xf]
  %v100 = vld [vmem:[%s0 + $0x64] sm:$0xf]
  %v101 = vld [vmem:[%s0 + $0x68] sm:$0xf]
  %v102 = vld [vmem:[%s0 + $0x6c] sm:$0xf]
  %v103 = vld [vmem:[%s0 + $0x70] sm:$0xf]
  %v104 = vld [vmem:[%s0 + $0x74] sm:$0xf]
  %v105 = vld [vmem:[%s0 + $0x78] sm:$0xf]
  %v106 = vld [vmem:[%s0 + $0x7c] sm:$0xf]
  %v107 = vld [vmem:[%s2] sm:$0xff]
  %v108 = vld [vmem:[%s2 + $0x8] sm:$0xff]
  %v109 = vld [vmem:[%s2 + $0x10] sm:$0xff]
  %v110 = vld [vmem:[%s2 + $0x18] sm:$0xff]
  %v111 = vld [vmem:[%s2 + $0x20] sm:$0xff]
  %v112 = vld [vmem:[%s2 + $0x28] sm:$0xff]
  %v113 = vld [vmem:[%s2 + $0x30] sm:$0xff]
  %v114 = vld [vmem:[%s2 + $0x38] sm:$0xff]
  %v115 = vld [vmem:[%s2 + $0x40] sm:$0xff]
  %v116 = vld [vmem:[%s2 + $0x48] sm:$0xff]
  %v117 = vld [vmem:[%s2 + $0x50] sm:$0xff]
  %v118 = vld [vmem:[%s2 + $0x58] sm:$0xff]
  %v119 = vld [vmem:[%s2 + $0x60] sm:$0xff]
  %v120 = vld [vmem:[%s2 + $0x68] sm:$0xff]
  %v121 = vld [vmem:[%s2 + $0x70] sm:$0xff]
  %v122 = vld [vmem:[%s2 + $0x78] sm:$0xff]
  %v123 = vld [vmem:[%s2 + $0x80] sm:$0xff]
  %v124 = vld [vmem:[%s2 + $0x88] sm:$0xff]
  %v125 = vld [vmem:[%s2 + $0x90] sm:$0xff]
  %v126 = vld [vmem:[%s2 + $0x98] sm:$0xff]
  %v127 = vld [vmem:[%s2 + $0xa0] sm:$0xff]
  %v128 = vld [vmem:[%s2 + $0xa8] sm:$0xff]
  %v129 = vld [vmem:[%s2 + $0xb0] sm:$0xff]
  %v130 = vld [vmem:[%s2 + $0xb8] sm:$0xff]
  %v131 = vld [vmem:[%s2 + $0xc0] sm:$0xff]
  %v132 = vld [vmem:[%s2 + $0xc8] sm:$0xff]
  %v133 = vld [vmem:[%s2 + $0xd0] sm:$0xff]
  %v134 = vld [vmem:[%s2 + $0xd8] sm:$0xff]
  %v135 = vld [vmem:[%s2 + $0xe0] sm:$0xff]
  %v136 = vld [vmem:[%s2 + $0xe8] sm:$0xff]
  %v137 = vld [vmem:[%s2 + $0xf0] sm:$0xff]
  %v138 = vld [vmem:[%s2 + $0xf8] sm:$0xff]
  %v139 = vld [vmem:[%s2 + $0x100] sm:$0xff]
  %v140 = vld [vmem:[%s2 + $0x108] sm:$0xff]
  %v141 = vld [vmem:[%s2 + $0x110] sm:$0xff]
  %v142 = vld [vmem:[%s2 + $0x118] sm:$0xff]
  %v143 = vld [vmem:[%s2 + $0x120] sm:$0xff]
  %v144 = vld [vmem:[%s2 + $0x128] sm:$0xff]
  %v145 = vld [vmem:[%s2 + $0x130] sm:$0xff]
  %v146 = vld [vmem:[%s2 + $0x138] sm:$0xff]
  %v147 = vld [vmem:[%s2 + $0x140] sm:$0xff]
  %v148 = vld [vmem:[%s2 + $0x148] sm:$0xff]
  %v149 = vld [vmem:[%s2 + $0x150] sm:$0xff]
  %v150 = vld [vmem:[%s2 + $0x158] sm:$0xff]
  %v151 = vld [vmem:[%s2 + $0x160] sm:$0xff]
  %v152 = vld [vmem:[%s2 + $0x168] sm:$0xff]
  %v153 = vld [vmem:[%s2 + $0x170] sm:$0xff]
  %v154 = vld [vmem:[%s2 + $0x178] sm:$0xff]
  %156 = vset.pattern.permute.xlu0 0
  %157 = vperm.xlu0 %156, %v107
  %v158 = vpop.permute.xlu0 %157
  %161 = vset.pattern.permute.xlu0 0
  %162 = vperm.xlu0 %161, %v108
  %v163 = vpop.permute.xlu0 %162
  %166 = vset.pattern.permute.xlu0 0
  %167 = vperm.xlu0 %166, %v109
  %v168 = vpop.permute.xlu0 %167
  %171 = vset.pattern.permute.xlu0 0
  %172 = vperm.xlu0 %171, %v110
  %v173 = vpop.permute.xlu0 %172
  %176 = vset.pattern.permute.xlu0 0
  %177 = vperm.xlu0 %176, %v111
  %v178 = vpop.permute.xlu0 %177
  %181 = vset.pattern.permute.xlu0 0
  %182 = vperm.xlu0 %181, %v112
  %v183 = vpop.permute.xlu0 %182
  %186 = vset.pattern.permute.xlu0 0
  %187 = vperm.xlu0 %186, %v113
  %v188 = vpop.permute.xlu0 %187
  %191 = vset.pattern.permute.xlu0 0
  %192 = vperm.xlu0 %191, %v114
  %v193 = vpop.permute.xlu0 %192
  %196 = vset.pattern.permute.xlu0 0
  %197 = vperm.xlu0 %196, %v115
  %v198 = vpop.permute.xlu0 %197
  %201 = vset.pattern.permute.xlu0 0
  %202 = vperm.xlu0 %201, %v116
  %v203 = vpop.permute.xlu0 %202
  %206 = vset.pattern.permute.xlu0 0
  %207 = vperm.xlu0 %206, %v117
  %v208 = vpop.permute.xlu0 %207
  %211 = vset.pattern.permute.xlu0 0
  %212 = vperm.xlu0 %211, %v118
  %v213 = vpop.permute.xlu0 %212
  %216 = vset.pattern.permute.xlu0 0
  %217 = vperm.xlu0 %216, %v119
  %v218 = vpop.permute.xlu0 %217
  %221 = vset.pattern.permute.xlu0 0
  %222 = vperm.xlu0 %221, %v120
  %v223 = vpop.permute.xlu0 %222
  %226 = vset.pattern.permute.xlu0 0
  %227 = vperm.xlu0 %226, %v121
  %v228 = vpop.permute.xlu0 %227
  %231 = vset.pattern.permute.xlu0 0
  %232 = vperm.xlu0 %231, %v122
  %v233 = vpop.permute.xlu0 %232
  %236 = vset.pattern.permute.xlu0 0
  %237 = vperm.xlu0 %236, %v123
  %v238 = vpop.permute.xlu0 %237
  %241 = vset.pattern.permute.xlu0 0
  %242 = vperm.xlu0 %241, %v124
  %v243 = vpop.permute.xlu0 %242
  %246 = vset.pattern.permute.xlu0 0
  %247 = vperm.xlu0 %246, %v125
  %v248 = vpop.permute.xlu0 %247
  %251 = vset.pattern.permute.xlu0 0
  %252 = vperm.xlu0 %251, %v126
  %v253 = vpop.permute.xlu0 %252
  %256 = vset.pattern.permute.xlu0 0
  %257 = vperm.xlu0 %256, %v127
  %v258 = vpop.permute.xlu0 %257
  %261 = vset.pattern.permute.xlu0 0
  %262 = vperm.xlu0 %261, %v128
  %v263 = vpop.permute.xlu0 %262
  %266 = vset.pattern.permute.xlu0 0
  %267 = vperm.xlu0 %266, %v129
  %v268 = vpop.permute.xlu0 %267
  %271 = vset.pattern.permute.xlu0 0
  %272 = vperm.xlu0 %271, %v130
  %v273 = vpop.permute.xlu0 %272
  %276 = vset.pattern.permute.xlu0 0
  %277 = vperm.xlu0 %276, %v131
  %v278 = vpop.permute.xlu0 %277
  %281 = vset.pattern.permute.xlu0 0
  %282 = vperm.xlu0 %281, %v132
  %v283 = vpop.permute.xlu0 %282
  %286 = vset.pattern.permute.xlu0 0
  %287 = vperm.xlu0 %286, %v133
  %v288 = vpop.permute.xlu0 %287
  %291 = vset.pattern.permute.xlu0 0
  %292 = vperm.xlu0 %291, %v134
  %v293 = vpop.permute.xlu0 %292
  %296 = vset.pattern.permute.xlu0 0
  %297 = vperm.xlu0 %296, %v135
  %v298 = vpop.permute.xlu0 %297
  %301 = vset.pattern.permute.xlu0 0
  %302 = vperm.xlu0 %301, %v136
  %v303 = vpop.permute.xlu0 %302
  %306 = vset.pattern.permute.xlu0 0
  %307 = vperm.xlu0 %306, %v137
  %v308 = vpop.permute.xlu0 %307
  %311 = vset.pattern.permute.xlu0 0
  %312 = vperm.xlu0 %311, %v138
  %v313 = vpop.permute.xlu0 %312
  %316 = vset.pattern.permute.xlu0 0
  %317 = vperm.xlu0 %316, %v139
  %v318 = vpop.permute.xlu0 %317
  %321 = vset.pattern.permute.xlu0 0
  %322 = vperm.xlu0 %321, %v140
  %v323 = vpop.permute.xlu0 %322
  %326 = vset.pattern.permute.xlu0 0
  %327 = vperm.xlu0 %326, %v141
  %v328 = vpop.permute.xlu0 %327
  %331 = vset.pattern.permute.xlu0 0
  %332 = vperm.xlu0 %331, %v142
  %v333 = vpop.permute.xlu0 %332
  %336 = vset.pattern.permute.xlu0 0
  %337 = vperm.xlu0 %336, %v143
  %v338 = vpop.permute.xlu0 %337
  %341 = vset.pattern.permute.xlu0 0
  %342 = vperm.xlu0 %341, %v144
  %v343 = vpop.permute.xlu0 %342
  %346 = vset.pattern.permute.xlu0 0
  %347 = vperm.xlu0 %346, %v145
  %v348 = vpop.permute.xlu0 %347
  %351 = vset.pattern.permute.xlu0 0
  %352 = vperm.xlu0 %351, %v146
  %v353 = vpop.permute.xlu0 %352
  %356 = vset.pattern.permute.xlu0 0
  %357 = vperm.xlu0 %356, %v147
  %v358 = vpop.permute.xlu0 %357
  %361 = vset.pattern.permute.xlu0 0
  %362 = vperm.xlu0 %361, %v148
  %v363 = vpop.permute.xlu0 %362
  %366 = vset.pattern.permute.xlu0 0
  %367 = vperm.xlu0 %366, %v149
  %v368 = vpop.permute.xlu0 %367
  %371 = vset.pattern.permute.xlu0 0
  %372 = vperm.xlu0 %371, %v150
  %v373 = vpop.permute.xlu0 %372
  %376 = vset.pattern.permute.xlu0 0
  %377 = vperm.xlu0 %376, %v151
  %v378 = vpop.permute.xlu0 %377
  %381 = vset.pattern.permute.xlu0 0
  %382 = vperm.xlu0 %381, %v152
  %v383 = vpop.permute.xlu0 %382
  %386 = vset.pattern.permute.xlu0 0
  %387 = vperm.xlu0 %386, %v153
  %v388 = vpop.permute.xlu0 %387
  %391 = vset.pattern.permute.xlu0 0
  %392 = vperm.xlu0 %391, %v154
  %v393 = vpop.permute.xlu0 %392
  %v443 = vunpack.c.l.b16 %v27
  %v444 = vunpack.c.h.b16 %v27
  %v445 = vunpack.c.l.b16 %v28
  %v446 = vunpack.c.h.b16 %v28
  %v447 = vunpack.c.l.b16 %v29
  %v448 = vunpack.c.h.b16 %v29
  %v449 = vunpack.c.l.b16 %v30
  %v450 = vunpack.c.h.b16 %v30
  %v451 = vunpack.c.l.b16 %v31
  %v452 = vunpack.c.h.b16 %v31
  %v453 = vunpack.c.l.b16 %v32
  %v454 = vunpack.c.h.b16 %v32
  %v455 = vunpack.c.l.b16 %v33
  %v456 = vunpack.c.h.b16 %v33
  %v457 = vunpack.c.l.b16 %v34
  %v458 = vunpack.c.h.b16 %v34
  %v459 = vunpack.c.l.b16 %v35
  %v460 = vunpack.c.h.b16 %v35
  %v461 = vunpack.c.l.b16 %v36
  %v462 = vunpack.c.h.b16 %v36
  %v463 = vunpack.c.l.b16 %v37
  %v464 = vunpack.c.h.b16 %v37
  %v465 = vunpack.c.l.b16 %v38
  %v466 = vunpack.c.h.b16 %v38
  %v467 = vunpack.c.l.b16 %v39
  %v468 = vunpack.c.h.b16 %v39
  %v469 = vunpack.c.l.b16 %v40
  %v470 = vunpack.c.h.b16 %v40
  %v471 = vunpack.c.l.b16 %v41
  %v472 = vunpack.c.h.b16 %v41
  %v473 = vunpack.c.l.b16 %v42
  %v474 = vunpack.c.h.b16 %v42
  %v475 = vunpack.c.l.b16 %v43
  %v476 = vunpack.c.h.b16 %v43
  %v477 = vunpack.c.l.b16 %v44
  %v478 = vunpack.c.h.b16 %v44
  %v479 = vunpack.c.l.b16 %v45
  %v480 = vunpack.c.h.b16 %v45
  %v481 = vunpack.c.l.b16 %v46
  %v482 = vunpack.c.h.b16 %v46
  %v483 = vunpack.c.l.b16 %v47
  %v484 = vunpack.c.h.b16 %v47
  %v485 = vunpack.c.l.b16 %v48
  %v486 = vunpack.c.h.b16 %v48
  %v487 = vunpack.c.l.b16 %v49
  %v488 = vunpack.c.h.b16 %v49
  %v489 = vunpack.c.l.b16 %v50
  %v490 = vunpack.c.h.b16 %v50
  %v491 = vunpack.c.l.b16 %v51
  %v492 = vunpack.c.h.b16 %v51
  %v493 = vunpack.c.l.b16 %v52
  %v494 = vunpack.c.h.b16 %v52
  %v495 = vunpack.c.l.b16 %v53
  %v496 = vunpack.c.h.b16 %v53
  %v497 = vunpack.c.l.b16 %v54
  %v498 = vunpack.c.h.b16 %v54
  %v499 = vunpack.c.l.b16 %v55
  %v500 = vunpack.c.h.b16 %v55
  %v501 = vunpack.c.l.b16 %v56
  %v502 = vunpack.c.h.b16 %v56
  %v503 = vunpack.c.l.b16 %v57
  %v504 = vunpack.c.h.b16 %v57
  %v505 = vunpack.c.l.b16 %v58
  %v506 = vunpack.c.h.b16 %v58
  %v507 = vunpack.c.l.b16 %v59
  %v508 = vunpack.c.h.b16 %v59
  %v509 = vunpack.c.l.b16 %v60
  %v510 = vunpack.c.h.b16 %v60
  %v511 = vunpack.c.l.b16 %v61
  %v512 = vunpack.c.h.b16 %v61
  %v513 = vunpack.c.l.b16 %v62
  %v514 = vunpack.c.h.b16 %v62
  %v515 = vunpack.c.l.b16 %v63
  %v516 = vunpack.c.h.b16 %v63
  %v517 = vunpack.c.l.b16 %v64
  %v518 = vunpack.c.h.b16 %v64
  %v519 = vunpack.c.l.b16 %v65
  %v520 = vunpack.c.h.b16 %v65
  %v521 = vunpack.c.l.b16 %v66
  %v522 = vunpack.c.h.b16 %v66
  %v523 = vunpack.c.l.b16 %v67
  %v524 = vunpack.c.h.b16 %v67
  %v525 = vunpack.c.l.b16 %v68
  %v526 = vunpack.c.h.b16 %v68
  %v527 = vunpack.c.l.b16 %v69
  %v528 = vunpack.c.h.b16 %v69
  %v529 = vunpack.c.l.b16 %v70
  %v530 = vunpack.c.h.b16 %v70
  %v531 = vunpack.c.l.b16 %v71
  %v532 = vunpack.c.h.b16 %v71
  %v533 = vunpack.c.l.b16 %v72
  %v534 = vunpack.c.h.b16 %v72
  %v535 = vunpack.c.l.b16 %v73
  %v536 = vunpack.c.h.b16 %v73
  %v537 = vunpack.c.l.b16 %v74
  %v538 = vunpack.c.h.b16 %v74
  %v539 = vpack.c.b16 %v445, %v443
  %v540 = vpack.c.b16 %v446, %v444
  %v541 = vpack.c.b16 %v449, %v447
  %v542 = vpack.c.b16 %v450, %v448
  %v543 = vpack.c.b16 %v453, %v451
  %v544 = vpack.c.b16 %v454, %v452
  %v545 = vpack.c.b16 %v457, %v455
  %v546 = vpack.c.b16 %v458, %v456
  %v547 = vpack.c.b16 %v461, %v459
  %v548 = vpack.c.b16 %v462, %v460
  %v549 = vpack.c.b16 %v465, %v463
  %v550 = vpack.c.b16 %v466, %v464
  %v551 = vpack.c.b16 %v469, %v467
  %v552 = vpack.c.b16 %v470, %v468
  %v553 = vpack.c.b16 %v473, %v471
  %v554 = vpack.c.b16 %v474, %v472
  %v555 = vpack.c.b16 %v477, %v475
  %v556 = vpack.c.b16 %v478, %v476
  %v557 = vpack.c.b16 %v481, %v479
  %v558 = vpack.c.b16 %v482, %v480
  %v559 = vpack.c.b16 %v485, %v483
  %v560 = vpack.c.b16 %v486, %v484
  %v561 = vpack.c.b16 %v489, %v487
  %v562 = vpack.c.b16 %v490, %v488
  %v563 = vpack.c.b16 %v493, %v491
  %v564 = vpack.c.b16 %v494, %v492
  %v565 = vpack.c.b16 %v497, %v495
  %v566 = vpack.c.b16 %v498, %v496
  %v567 = vpack.c.b16 %v501, %v499
  %v568 = vpack.c.b16 %v502, %v500
  %v569 = vpack.c.b16 %v505, %v503
  %v570 = vpack.c.b16 %v506, %v504
  %v571 = vpack.c.b16 %v509, %v507
  %v572 = vpack.c.b16 %v510, %v508
  %v573 = vpack.c.b16 %v513, %v511
  %v574 = vpack.c.b16 %v514, %v512
  %v575 = vpack.c.b16 %v517, %v515
  %v576 = vpack.c.b16 %v518, %v516
  %v577 = vpack.c.b16 %v521, %v519
  %v578 = vpack.c.b16 %v522, %v520
  %v579 = vpack.c.b16 %v525, %v523
  %v580 = vpack.c.b16 %v526, %v524
  %v581 = vpack.c.b16 %v529, %v527
  %v582 = vpack.c.b16 %v530, %v528
  %v583 = vpack.c.b16 %v533, %v531
  %v584 = vpack.c.b16 %v534, %v532
  %v585 = vpack.c.b16 %v537, %v535
  %v586 = vpack.c.b16 %v538, %v536
  %v667 = vunpack.c.l.b16 %v75
  %v668 = vunpack.c.l.b16 %v76
  %v669 = vunpack.c.l.b16 %v77
  %v670 = vunpack.c.l.b16 %v78
  %v671 = vunpack.c.l.b16 %v79
  %v672 = vunpack.c.l.b16 %v80
  %v673 = vunpack.c.l.b16 %v81
  %v674 = vunpack.c.l.b16 %v82
  %v675 = vunpack.c.l.b16 %v83
  %v676 = vunpack.c.l.b16 %v84
  %v677 = vunpack.c.l.b16 %v85
  %v678 = vunpack.c.l.b16 %v86
  %v679 = vunpack.c.l.b16 %v87
  %v680 = vunpack.c.l.b16 %v88
  %v681 = vunpack.c.l.b16 %v89
  %v682 = vunpack.c.l.b16 %v90
  %v683 = vunpack.c.l.b16 %v91
  %v684 = vunpack.c.l.b16 %v92
  %v685 = vunpack.c.l.b16 %v93
  %v686 = vunpack.c.l.b16 %v94
  %v687 = vunpack.c.l.b16 %v95
  %v688 = vunpack.c.l.b16 %v96
  %v689 = vunpack.c.l.b16 %v97
  %v690 = vunpack.c.l.b16 %v98
  %v691 = vunpack.c.l.b16 %v99
  %v692 = vunpack.c.l.b16 %v100
  %v693 = vunpack.c.l.b16 %v101
  %v694 = vunpack.c.l.b16 %v102
  %v695 = vunpack.c.l.b16 %v103
  %v696 = vunpack.c.l.b16 %v104
  %v697 = vunpack.c.l.b16 %v105
  %v698 = vunpack.c.l.b16 %v106
  %v699 = vpack.c.b16 %v668, %v667
  %v700 = vpack.c.b16 %v670, %v669
  %v701 = vpack.c.b16 %v672, %v671
  %v702 = vpack.c.b16 %v674, %v673
  %v703 = vpack.c.b16 %v676, %v675
  %v704 = vpack.c.b16 %v678, %v677
  %v705 = vpack.c.b16 %v680, %v679
  %v706 = vpack.c.b16 %v682, %v681
  %v707 = vpack.c.b16 %v684, %v683
  %v708 = vpack.c.b16 %v686, %v685
  %v709 = vpack.c.b16 %v688, %v687
  %v710 = vpack.c.b16 %v690, %v689
  %v711 = vpack.c.b16 %v692, %v691
  %v712 = vpack.c.b16 %v694, %v693
  %v713 = vpack.c.b16 %v696, %v695
  %v714 = vpack.c.b16 %v698, %v697
  %731 = vmatprep.subr.bf16.mxu0 0
  %732 = vmatpush1.bf16.msra.mxu0 %v699
  %733 = vmatprep.subr.bf16.mxu0 0
  %734 = vmatpush1.bf16.msra.mxu0 %v700
  %735 = vmatprep.subr.bf16.mxu0 0
  %736 = vmatpush1.bf16.msra.mxu0 %v701
  %737 = vmatprep.subr.bf16.mxu0 0
  %738 = vmatpush1.bf16.msra.mxu0 %v702
  %739 = vmatprep.subr.bf16.mxu0 0
  %740 = vmatpush1.bf16.msra.mxu0 %v703
  %741 = vmatprep.subr.bf16.mxu0 0
  %742 = vmatpush1.bf16.msra.mxu0 %v704
  %743 = vmatprep.subr.bf16.mxu0 0
  %744 = vmatpush1.bf16.msra.mxu0 %v705
  %745 = vmatprep.subr.bf16.mxu0 0
  %746 = vmatpush1.bf16.msra.mxu0 %v706
  %747 = vmatprep.subr.bf16.mxu0 0
  %748 = vmatpush1.bf16.msra.mxu0 %v707
  %749 = vmatprep.subr.bf16.mxu0 0
  %750 = vmatpush1.bf16.msra.mxu0 %v708
  %751 = vmatprep.subr.bf16.mxu0 0
  %752 = vmatpush1.bf16.msra.mxu0 %v709
  %753 = vmatprep.subr.bf16.mxu0 0
  %754 = vmatpush1.bf16.msra.mxu0 %v710
  %755 = vmatprep.subr.bf16.mxu0 0
  %756 = vmatpush1.bf16.msra.mxu0 %v711
  %757 = vmatprep.subr.bf16.mxu0 0
  %758 = vmatpush1.bf16.msra.mxu0 %v712
  %759 = vmatprep.subr.bf16.mxu0 0
  %760 = vmatpush1.bf16.msra.mxu0 %v713
  %761 = vmatprep.subr.bf16.mxu0 0
  %762 = vmatpush1.bf16.msra.mxu0 %v714
  %763 = vmatprep.mubr.bf16.mxu0 %v540
  %764 = vmatmul.mubr.bf16.gmra.mrb[0].mxu0 %v539
  %v765 = vpop.f32.mrb[0].mxu0
  %v766 = vadd.f32 %v158, %v765
  %v767 = vpop.f32.mrb[0].mxu0
  %v768 = vpop.f32.mrb[0].mxu0
  %v769 = vadd.f32 %v163, %v768
  %v770 = vpop.f32.mrb[0].mxu0
  %771 = vmatprep.mubr.bf16.mxu0 %v542
  %772 = vmatmul.mubr.bf16.gmra.mrb[0].mxu0 %v541
  %v773 = vpop.f32.mrb[0].mxu0
  %v774 = vadd.f32 %v168, %v773
  %v775 = vpop.f32.mrb[0].mxu0
  %v776 = vpop.f32.mrb[0].mxu0
  %v777 = vadd.f32 %v173, %v776
  %v778 = vpop.f32.mrb[0].mxu0
  %779 = vmatprep.mubr.bf16.mxu0 %v544
  %780 = vmatmul.mubr.bf16.gmra.mrb[0].mxu0 %v543
  %v781 = vpop.f32.mrb[0].mxu0
  %v782 = vadd.f32 %v178, %v781
  %v783 = vpop.f32.mrb[0].mxu0
  %v784 = vpop.f32.mrb[0].mxu0
  %v785 = vadd.f32 %v183, %v784
  %v786 = vpop.f32.mrb[0].mxu0
  %787 = vmatprep.mubr.bf16.mxu0 %v546
  %788 = vmatmul.mubr.bf16.gmra.mrb[0].mxu0 %v545
  %v789 = vpop.f32.mrb[0].mxu0
  %v790 = vadd.f32 %v188, %v789
  %v791 = vpop.f32.mrb[0].mxu0
  %v792 = vpop.f32.mrb[0].mxu0
  %v793 = vadd.f32 %v193, %v792
  %v794 = vpop.f32.mrb[0].mxu0
  %795 = vmatprep.mubr.bf16.mxu0 %v548
  %796 = vmatmul.mubr.bf16.gmra.mrb[0].mxu0 %v547
  %v797 = vpop.f32.mrb[0].mxu0
  %v798 = vadd.f32 %v198, %v797
  %v799 = vpop.f32.mrb[0].mxu0
  %v800 = vpop.f32.mrb[0].mxu0
  %v801 = vadd.f32 %v203, %v800
  %v802 = vpop.f32.mrb[0].mxu0
  %803 = vmatprep.mubr.bf16.mxu0 %v550
  %804 = vmatmul.mubr.bf16.gmra.mrb[0].mxu0 %v549
  %v805 = vpop.f32.mrb[0].mxu0
  %v806 = vadd.f32 %v208, %v805
  %v807 = vpop.f32.mrb[0].mxu0
  %v808 = vpop.f32.mrb[0].mxu0
  %v809 = vadd.f32 %v213, %v808
  %v810 = vpop.f32.mrb[0].mxu0
  %811 = vmatprep.mubr.bf16.mxu0 %v552
  %812 = vmatmul.mubr.bf16.gmra.mrb[0].mxu0 %v551
  %v813 = vpop.f32.mrb[0].mxu0
  %v814 = vadd.f32 %v218, %v813
  %v815 = vpop.f32.mrb[0].mxu0
  %v816 = vpop.f32.mrb[0].mxu0
  %v817 = vadd.f32 %v223, %v816
  %v818 = vpop.f32.mrb[0].mxu0
  %819 = vmatprep.mubr.bf16.mxu0 %v554
  %820 = vmatmul.mubr.bf16.gmra.mrb[0].mxu0 %v553
  %v821 = vpop.f32.mrb[0].mxu0
  %v822 = vadd.f32 %v228, %v821
  %v823 = vpop.f32.mrb[0].mxu0
  %v824 = vpop.f32.mrb[0].mxu0
  %v825 = vadd.f32 %v233, %v824
  %v826 = vpop.f32.mrb[0].mxu0
  %827 = vmatprep.mubr.bf16.mxu0 %v556
  %828 = vmatmul.mubr.bf16.gmra.mrb[0].mxu0 %v555
  %v829 = vpop.f32.mrb[0].mxu0
  %v830 = vadd.f32 %v238, %v829
  %v831 = vpop.f32.mrb[0].mxu0
  %v832 = vpop.f32.mrb[0].mxu0
  %v833 = vadd.f32 %v243, %v832
  %v834 = vpop.f32.mrb[0].mxu0
  %835 = vmatprep.mubr.bf16.mxu0 %v558
  %836 = vmatmul.mubr.bf16.gmra.mrb[0].mxu0 %v557
  %v837 = vpop.f32.mrb[0].mxu0
  %v838 = vadd.f32 %v248, %v837
  %v839 = vpop.f32.mrb[0].mxu0
  %v840 = vpop.f32.mrb[0].mxu0
  %v841 = vadd.f32 %v253, %v840
  %v842 = vpop.f32.mrb[0].mxu0
  %843 = vmatprep.mubr.bf16.mxu0 %v560
  %844 = vmatmul.mubr.bf16.gmra.mrb[0].mxu0 %v559
  %v845 = vpop.f32.mrb[0].mxu0
  %v846 = vadd.f32 %v258, %v845
  %v847 = vpop.f32.mrb[0].mxu0
  %v848 = vpop.f32.mrb[0].mxu0
  %v849 = vadd.f32 %v263, %v848
  %v850 = vpop.f32.mrb[0].mxu0
  %851 = vmatprep.mubr.bf16.mxu0 %v562
  %852 = vmatmul.mubr.bf16.gmra.mrb[0].mxu0 %v561
  %v853 = vpop.f32.mrb[0].mxu0
  %v854 = vadd.f32 %v268, %v853
  %v855 = vpop.f32.mrb[0].mxu0
  %v856 = vpop.f32.mrb[0].mxu0
  %v857 = vadd.f32 %v273, %v856
  %v858 = vpop.f32.mrb[0].mxu0
  %859 = vmatprep.mubr.bf16.mxu0 %v564
  %860 = vmatmul.mubr.bf16.gmra.mrb[0].mxu0 %v563
  %v861 = vpop.f32.mrb[0].mxu0
  %v862 = vadd.f32 %v278, %v861
  %v863 = vpop.f32.mrb[0].mxu0
  %v864 = vpop.f32.mrb[0].mxu0
  %v865 = vadd.f32 %v283, %v864
  %v866 = vpop.f32.mrb[0].mxu0
  %867 = vmatprep.mubr.bf16.mxu0 %v566
  %868 = vmatmul.mubr.bf16.gmra.mrb[0].mxu0 %v565
  %v869 = vpop.f32.mrb[0].mxu0
  %v870 = vadd.f32 %v288, %v869
  %v871 = vpop.f32.mrb[0].mxu0
  %v872 = vpop.f32.mrb[0].mxu0
  %v873 = vadd.f32 %v293, %v872
  %v874 = vpop.f32.mrb[0].mxu0
  %875 = vmatprep.mubr.bf16.mxu0 %v568
  %876 = vmatmul.mubr.bf16.gmra.mrb[0].mxu0 %v567
  %v877 = vpop.f32.mrb[0].mxu0
  %v878 = vadd.f32 %v298, %v877
  %v879 = vpop.f32.mrb[0].mxu0
  %v880 = vpop.f32.mrb[0].mxu0
  %v881 = vadd.f32 %v303, %v880
  %v882 = vpop.f32.mrb[0].mxu0
  %883 = vmatprep.mubr.bf16.mxu0 %v570
  %884 = vmatmul.mubr.bf16.gmra.mrb[0].mxu0 %v569
  %v885 = vpop.f32.mrb[0].mxu0
  %v886 = vadd.f32 %v308, %v885
  %v887 = vpop.f32.mrb[0].mxu0
  %v888 = vpop.f32.mrb[0].mxu0
  %v889 = vadd.f32 %v313, %v888
  %v890 = vpop.f32.mrb[0].mxu0
  %891 = vmatprep.mubr.bf16.mxu0 %v572
  %892 = vmatmul.mubr.bf16.gmra.mrb[0].mxu0 %v571
  %v893 = vpop.f32.mrb[0].mxu0
  %v894 = vadd.f32 %v318, %v893
  %v895 = vpop.f32.mrb[0].mxu0
  %v896 = vpop.f32.mrb[0].mxu0
  %v897 = vadd.f32 %v323, %v896
  %v898 = vpop.f32.mrb[0].mxu0
  %899 = vmatprep.mubr.bf16.mxu0 %v574
  %900 = vmatmul.mubr.bf16.gmra.mrb[0].mxu0 %v573
  %v901 = vpop.f32.mrb[0].mxu0
  %v902 = vadd.f32 %v328, %v901
  %v903 = vpop.f32.mrb[0].mxu0
  %v904 = vpop.f32.mrb[0].mxu0
  %v905 = vadd.f32 %v333, %v904
  %v906 = vpop.f32.mrb[0].mxu0
  %907 = vmatprep.mubr.bf16.mxu0 %v576
  %908 = vmatmul.mubr.bf16.gmra.mrb[0].mxu0 %v575
  %v909 = vpop.f32.mrb[0].mxu0
  %v910 = vadd.f32 %v338, %v909
  %v911 = vpop.f32.mrb[0].mxu0
  %v912 = vpop.f32.mrb[0].mxu0
  %v913 = vadd.f32 %v343, %v912
  %v914 = vpop.f32.mrb[0].mxu0
  %915 = vmatprep.mubr.bf16.mxu0 %v578
  %916 = vmatmul.mubr.bf16.gmra.mrb[0].mxu0 %v577
  %v917 = vpop.f32.mrb[0].mxu0
  %v918 = vadd.f32 %v348, %v917
  %v919 = vpop.f32.mrb[0].mxu0
  %v920 = vpop.f32.mrb[0].mxu0
  %v921 = vadd.f32 %v353, %v920
  %v922 = vpop.f32.mrb[0].mxu0
  %923 = vmatprep.mubr.bf16.mxu0 %v580
  %924 = vmatmul.mubr.bf16.gmra.mrb[0].mxu0 %v579
  %v925 = vpop.f32.mrb[0].mxu0
  %v926 = vadd.f32 %v358, %v925
  %v927 = vpop.f32.mrb[0].mxu0
  %v928 = vpop.f32.mrb[0].mxu0
  %v929 = vadd.f32 %v363, %v928
  %v930 = vpop.f32.mrb[0].mxu0
  %931 = vmatprep.mubr.bf16.mxu0 %v582
  %932 = vmatmul.mubr.bf16.gmra.mrb[0].mxu0 %v581
  %v933 = vpop.f32.mrb[0].mxu0
  %v934 = vadd.f32 %v368, %v933
  %v935 = vpop.f32.mrb[0].mxu0
  %v936 = vpop.f32.mrb[0].mxu0
  %v937 = vadd.f32 %v373, %v936
  %v938 = vpop.f32.mrb[0].mxu0
  %939 = vmatprep.mubr.bf16.mxu0 %v584
  %940 = vmatmul.mubr.bf16.gmra.mrb[0].mxu0 %v583
  %v941 = vpop.f32.mrb[0].mxu0
  %v942 = vadd.f32 %v378, %v941
  %v943 = vpop.f32.mrb[0].mxu0
  %v944 = vpop.f32.mrb[0].mxu0
  %v945 = vadd.f32 %v383, %v944
  %v946 = vpop.f32.mrb[0].mxu0
  %947 = vmatprep.mubr.bf16.mxu0 %v586
  %948 = vmatmul.mubr.bf16.gmra.mrb[0].mxu0 %v585
  %v949 = vpop.f32.mrb[0].mxu0
  %v950 = vadd.f32 %v388, %v949
  %v951 = vpop.f32.mrb[0].mxu0
  %v952 = vpop.f32.mrb[0].mxu0
  %v953 = vadd.f32 %v393, %v952
  %v954 = vpop.f32.mrb[0].mxu0
  %955 = vdwg.mxu0
  %v956 = vmax.f32 %v766, 0.0
  %v957 = vmax.f32 %v769, 0.0
  %v958 = vmax.f32 %v774, 0.0
  %v959 = vmax.f32 %v777, 0.0
  %v960 = vmax.f32 %v782, 0.0
  %v961 = vmax.f32 %v785, 0.0
  %v962 = vmax.f32 %v790, 0.0
  %v963 = vmax.f32 %v793, 0.0
  %v964 = vmax.f32 %v798, 0.0
  %v965 = vmax.f32 %v801, 0.0
  %v966 = vmax.f32 %v806, 0.0
  %v967 = vmax.f32 %v809, 0.0
  %v968 = vmax.f32 %v814, 0.0
  %v969 = vmax.f32 %v817, 0.0
  %v970 = vmax.f32 %v822, 0.0
  %v971 = vmax.f32 %v825, 0.0
  %v972 = vmax.f32 %v830, 0.0
  %v973 = vmax.f32 %v833, 0.0
  %v974 = vmax.f32 %v838, 0.0
  %v975 = vmax.f32 %v841, 0.0
  %v976 = vmax.f32 %v846, 0.0
  %v977 = vmax.f32 %v849, 0.0
  %v978 = vmax.f32 %v854, 0.0
  %v979 = vmax.f32 %v857, 0.0
  %v980 = vmax.f32 %v862, 0.0
  %v981 = vmax.f32 %v865, 0.0
  %v982 = vmax.f32 %v870, 0.0
  %v983 = vmax.f32 %v873, 0.0
  %v984 = vmax.f32 %v878, 0.0
  %v985 = vmax.f32 %v881, 0.0
  %v986 = vmax.f32 %v886, 0.0
  %v987 = vmax.f32 %v889, 0.0
  %v988 = vmax.f32 %v894, 0.0
  %v989 = vmax.f32 %v897, 0.0
  %v990 = vmax.f32 %v902, 0.0
  %v991 = vmax.f32 %v905, 0.0
  %v992 = vmax.f32 %v910, 0.0
  %v993 = vmax.f32 %v913, 0.0
  %v994 = vmax.f32 %v918, 0.0
  %v995 = vmax.f32 %v921, 0.0
  %v996 = vmax.f32 %v926, 0.0
  %v997 = vmax.f32 %v929, 0.0
  %v998 = vmax.f32 %v934, 0.0
  %v999 = vmax.f32 %v937, 0.0
  %v1000 = vmax.f32 %v942, 0.0
  %v1001 = vmax.f32 %v945, 0.0
  %v1002 = vmax.f32 %v950, 0.0
  %v1003 = vmax.f32 %v953, 0.0
  %v1004 = vld [vmem:[%s3] sm:$0xff]
  %v1005 = vld [vmem:[%s3 + $0x8] sm:$0xf]
  %v1006 = vld [vmem:[%s3 + $0xc] sm:$0xff]
  %v1007 = vld [vmem:[%s3 + $0x14] sm:$0xf]
  %v1008 = vld [vmem:[%s3 + $0x18] sm:$0xff]
  %v1009 = vld [vmem:[%s3 + $0x20] sm:$0xf]
  %v1010 = vld [vmem:[%s3 + $0x24] sm:$0xff]
  %v1011 = vld [vmem:[%s3 + $0x2c] sm:$0xf]
  %v1012 = vld [vmem:[%s3 + $0x30] sm:$0xff]
  %v1013 = vld [vmem:[%s3 + $0x38] sm:$0xf]
  %v1014 = vld [vmem:[%s3 + $0x3c] sm:$0xff]
  %v1015 = vld [vmem:[%s3 + $0x44] sm:$0xf]
  %v1016 = vld [vmem:[%s3 + $0x48] sm:$0xff]
  %v1017 = vld [vmem:[%s3 + $0x50] sm:$0xf]
  %v1018 = vld [vmem:[%s3 + $0x54] sm:$0xff]
  %v1019 = vld [vmem:[%s3 + $0x5c] sm:$0xf]
  %v1020 = vld [vmem:[%s3 + $0x60] sm:$0xff]
  %v1021 = vld [vmem:[%s3 + $0x68] sm:$0xf]
  %v1022 = vld [vmem:[%s3 + $0x6c] sm:$0xff]
  %v1023 = vld [vmem:[%s3 + $0x74] sm:$0xf]
  %v1024 = vld [vmem:[%s3 + $0x78] sm:$0xff]
  %v1025 = vld [vmem:[%s3 + $0x80] sm:$0xf]
  %v1026 = vld [vmem:[%s3 + $0x84] sm:$0xff]
  %v1027 = vld [vmem:[%s3 + $0x8c] sm:$0xf]
  %v1028 = vld [vmem:[%s3 + $0x90] sm:$0xff]
  %v1029 = vld [vmem:[%s3 + $0x98] sm:$0xf]
  %v1030 = vld [vmem:[%s3 + $0x9c] sm:$0xff]
  %v1031 = vld [vmem:[%s3 + $0xa4] sm:$0xf]
  %v1032 = vld [vmem:[%s3 + $0xa8] sm:$0xff]
  %v1033 = vld [vmem:[%s3 + $0xb0] sm:$0xf]
  %v1034 = vld [vmem:[%s3 + $0xb4] sm:$0xff]
  %v1035 = vld [vmem:[%s3 + $0xbc] sm:$0xf]
  %v1036 = vld [vmem:[%s3 + $0xc0] sm:$0xff]
  %v1037 = vld [vmem:[%s3 + $0xc8] sm:$0xf]
  %v1038 = vld [vmem:[%s3 + $0xcc] sm:$0xff]
  %v1039 = vld [vmem:[%s3 + $0xd4] sm:$0xf]
  %v1040 = vld [vmem:[%s3 + $0xd8] sm:$0xff]
  %v1041 = vld [vmem:[%s3 + $0xe0] sm:$0xf]
  %v1042 = vld [vmem:[%s3 + $0xe4] sm:$0xff]
  %v1043 = vld [vmem:[%s3 + $0xec] sm:$0xf]
  %v1044 = vld [vmem:[%s3 + $0xf0] sm:$0xff]
  %v1045 = vld [vmem:[%s3 + $0xf8] sm:$0xf]
  %v1046 = vld [vmem:[%s3 + $0xfc] sm:$0xff]
  %v1047 = vld [vmem:[%s3 + $0x104] sm:$0xf]
  %v1048 = vld [vmem:[%s3 + $0x108] sm:$0xff]
  %v1049 = vld [vmem:[%s3 + $0x110] sm:$0xf]
  %v1050 = vld [vmem:[%s3 + $0x114] sm:$0xff]
  %v1051 = vld [vmem:[%s3 + $0x11c] sm:$0xf]
  %v1052 = vld [vmem:[%s3 + $0x120] sm:$0xff]
  %v1053 = vld [vmem:[%s3 + $0x128] sm:$0xf]
  %v1054 = vld [vmem:[%s3 + $0x12c] sm:$0xff]
  %v1055 = vld [vmem:[%s3 + $0x134] sm:$0xf]
  %v1056 = vld [vmem:[%s3 + $0x138] sm:$0xff]
  %v1057 = vld [vmem:[%s3 + $0x140] sm:$0xf]
  %v1058 = vld [vmem:[%s3 + $0x144] sm:$0xff]
  %v1059 = vld [vmem:[%s3 + $0x14c] sm:$0xf]
  %v1060 = vld [vmem:[%s3 + $0x150] sm:$0xff]
  %v1061 = vld [vmem:[%s3 + $0x158] sm:$0xf]
  %v1062 = vld [vmem:[%s3 + $0x15c] sm:$0xff]
  %v1063 = vld [vmem:[%s3 + $0x164] sm:$0xf]
  %v1064 = vld [vmem:[%s3 + $0x168] sm:$0xff]
  %v1065 = vld [vmem:[%s3 + $0x170] sm:$0xf]
  %v1066 = vld [vmem:[%s3 + $0x174] sm:$0xff]
  %v1067 = vld [vmem:[%s3 + $0x17c] sm:$0xf]
  %v1068 = vpack.c.bf16 %v957, %v956
  %v1069 = vpack.c.bf16 %v959, %v958
  %v1070 = vpack.c.bf16 %v961, %v960
  %v1071 = vpack.c.bf16 %v963, %v962
  %v1072 = vpack.c.bf16 %v965, %v964
  %v1073 = vpack.c.bf16 %v967, %v966
  %v1074 = vpack.c.bf16 %v969, %v968
  %v1075 = vpack.c.bf16 %v971, %v970
  %v1076 = vpack.c.bf16 %v973, %v972
  %v1077 = vpack.c.bf16 %v975, %v974
  %v1078 = vpack.c.bf16 %v977, %v976
  %v1079 = vpack.c.bf16 %v979, %v978
  %v1080 = vpack.c.bf16 %v981, %v980
  %v1081 = vpack.c.bf16 %v983, %v982
  %v1082 = vpack.c.bf16 %v985, %v984
  %v1083 = vpack.c.bf16 %v987, %v986
  %v1084 = vpack.c.bf16 %v989, %v988
  %v1085 = vpack.c.bf16 %v991, %v990
  %v1086 = vpack.c.bf16 %v993, %v992
  %v1087 = vpack.c.bf16 %v995, %v994
  %v1088 = vpack.c.bf16 %v997, %v996
  %v1089 = vpack.c.bf16 %v999, %v998
  %v1090 = vpack.c.bf16 %v1001, %v1000
  %v1091 = vpack.c.bf16 %v1003, %v1002
  %v1092 = vld [vmem:[%s4] sm:$0xff]
  %v1093 = vld [vmem:[%s4 + $0x8] sm:$0xff]
  %v1094 = vld [vmem:[%s4 + $0x10] sm:$0xff]
  %v1095 = vld [vmem:[%s4 + $0x18] sm:$0xff]
  %v1096 = vld [vmem:[%s4 + $0x20] sm:$0xff]
  %v1097 = vld [vmem:[%s4 + $0x28] sm:$0xff]
  %v1098 = vld [vmem:[%s4 + $0x30] sm:$0xff]
  %v1099 = vld [vmem:[%s4 + $0x38] sm:$0xff]
  %v1100 = vld [vmem:[%s4 + $0x40] sm:$0xff]
  %v1101 = vld [vmem:[%s4 + $0x48] sm:$0xff]
  %v1102 = vld [vmem:[%s4 + $0x50] sm:$0xff]
  %v1103 = vld [vmem:[%s4 + $0x58] sm:$0xff]
  %v1104 = vld [vmem:[%s4 + $0x60] sm:$0xff]
  %v1105 = vld [vmem:[%s4 + $0x68] sm:$0xff]
  %v1106 = vld [vmem:[%s4 + $0x70] sm:$0xff]
  %v1107 = vld [vmem:[%s4 + $0x78] sm:$0xff]
  %v1108 = vld [vmem:[%s4 + $0x80] sm:$0xff]
  %v1109 = vld [vmem:[%s4 + $0x88] sm:$0xff]
  %v1110 = vld [vmem:[%s4 + $0x90] sm:$0xff]
  %v1111 = vld [vmem:[%s4 + $0x98] sm:$0xff]
  %v1112 = vld [vmem:[%s4 + $0xa0] sm:$0xff]
  %v1113 = vld [vmem:[%s4 + $0xa8] sm:$0xff]
  %v1114 = vld [vmem:[%s4 + $0xb0] sm:$0xff]
  %v1115 = vld [vmem:[%s4 + $0xb8] sm:$0xff]
  %v1116 = vld [vmem:[%s4 + $0xc0] sm:$0xff]
  %v1117 = vld [vmem:[%s4 + $0xc8] sm:$0xff]
  %v1118 = vld [vmem:[%s4 + $0xd0] sm:$0xff]
  %v1119 = vld [vmem:[%s4 + $0xd8] sm:$0xff]
  %v1120 = vld [vmem:[%s4 + $0xe0] sm:$0xff]
  %v1121 = vld [vmem:[%s4 + $0xe8] sm:$0xff]
  %v1122 = vld [vmem:[%s4 + $0xf0] sm:$0xff]
  %v1123 = vld [vmem:[%s4 + $0xf8] sm:$0xff]
  %1125 = vset.pattern.permute.xlu0 0
  %1126 = vperm.xlu0 %1125, %v1092
  %v1127 = vpop.permute.xlu0 %1126
  %1130 = vset.pattern.permute.xlu0 0
  %1131 = vperm.xlu0 %1130, %v1093
  %v1132 = vpop.permute.xlu0 %1131
  %1135 = vset.pattern.permute.xlu0 0
  %1136 = vperm.xlu0 %1135, %v1094
  %v1137 = vpop.permute.xlu0 %1136
  %1140 = vset.pattern.permute.xlu0 0
  %1141 = vperm.xlu0 %1140, %v1095
  %v1142 = vpop.permute.xlu0 %1141
  %1145 = vset.pattern.permute.xlu0 0
  %1146 = vperm.xlu0 %1145, %v1096
  %v1147 = vpop.permute.xlu0 %1146
  %1150 = vset.pattern.permute.xlu0 0
  %1151 = vperm.xlu0 %1150, %v1097
  %v1152 = vpop.permute.xlu0 %1151
  %1155 = vset.pattern.permute.xlu0 0
  %1156 = vperm.xlu0 %1155, %v1098
  %v1157 = vpop.permute.xlu0 %1156
  %1160 = vset.pattern.permute.xlu0 0
  %1161 = vperm.xlu0 %1160, %v1099
  %v1162 = vpop.permute.xlu0 %1161
  %1165 = vset.pattern.permute.xlu0 0
  %1166 = vperm.xlu0 %1165, %v1100
  %v1167 = vpop.permute.xlu0 %1166
  %1170 = vset.pattern.permute.xlu0 0
  %1171 = vperm.xlu0 %1170, %v1101
  %v1172 = vpop.permute.xlu0 %1171
  %1175 = vset.pattern.permute.xlu0 0
  %1176 = vperm.xlu0 %1175, %v1102
  %v1177 = vpop.permute.xlu0 %1176
  %1180 = vset.pattern.permute.xlu0 0
  %1181 = vperm.xlu0 %1180, %v1103
  %v1182 = vpop.permute.xlu0 %1181
  %1185 = vset.pattern.permute.xlu0 0
  %1186 = vperm.xlu0 %1185, %v1104
  %v1187 = vpop.permute.xlu0 %1186
  %1190 = vset.pattern.permute.xlu0 0
  %1191 = vperm.xlu0 %1190, %v1105
  %v1192 = vpop.permute.xlu0 %1191
  %1195 = vset.pattern.permute.xlu0 0
  %1196 = vperm.xlu0 %1195, %v1106
  %v1197 = vpop.permute.xlu0 %1196
  %1200 = vset.pattern.permute.xlu0 0
  %1201 = vperm.xlu0 %1200, %v1107
  %v1202 = vpop.permute.xlu0 %1201
  %1205 = vset.pattern.permute.xlu0 0
  %1206 = vperm.xlu0 %1205, %v1108
  %v1207 = vpop.permute.xlu0 %1206
  %1210 = vset.pattern.permute.xlu0 0
  %1211 = vperm.xlu0 %1210, %v1109
  %v1212 = vpop.permute.xlu0 %1211
  %1215 = vset.pattern.permute.xlu0 0
  %1216 = vperm.xlu0 %1215, %v1110
  %v1217 = vpop.permute.xlu0 %1216
  %1220 = vset.pattern.permute.xlu0 0
  %1221 = vperm.xlu0 %1220, %v1111
  %v1222 = vpop.permute.xlu0 %1221
  %1225 = vset.pattern.permute.xlu0 0
  %1226 = vperm.xlu0 %1225, %v1112
  %v1227 = vpop.permute.xlu0 %1226
  %1230 = vset.pattern.permute.xlu0 0
  %1231 = vperm.xlu0 %1230, %v1113
  %v1232 = vpop.permute.xlu0 %1231
  %1235 = vset.pattern.permute.xlu0 0
  %1236 = vperm.xlu0 %1235, %v1114
  %v1237 = vpop.permute.xlu0 %1236
  %1240 = vset.pattern.permute.xlu0 0
  %1241 = vperm.xlu0 %1240, %v1115
  %v1242 = vpop.permute.xlu0 %1241
  %1245 = vset.pattern.permute.xlu0 0
  %1246 = vperm.xlu0 %1245, %v1116
  %v1247 = vpop.permute.xlu0 %1246
  %1250 = vset.pattern.permute.xlu0 0
  %1251 = vperm.xlu0 %1250, %v1117
  %v1252 = vpop.permute.xlu0 %1251
  %1255 = vset.pattern.permute.xlu0 0
  %1256 = vperm.xlu0 %1255, %v1118
  %v1257 = vpop.permute.xlu0 %1256
  %1260 = vset.pattern.permute.xlu0 0
  %1261 = vperm.xlu0 %1260, %v1119
  %v1262 = vpop.permute.xlu0 %1261
  %1265 = vset.pattern.permute.xlu0 0
  %1266 = vperm.xlu0 %1265, %v1120
  %v1267 = vpop.permute.xlu0 %1266
  %1270 = vset.pattern.permute.xlu0 0
  %1271 = vperm.xlu0 %1270, %v1121
  %v1272 = vpop.permute.xlu0 %1271
  %1275 = vset.pattern.permute.xlu0 0
  %1276 = vperm.xlu0 %1275, %v1122
  %v1277 = vpop.permute.xlu0 %1276
  %1280 = vset.pattern.permute.xlu0 0
  %1281 = vperm.xlu0 %1280, %v1123
  %v1282 = vpop.permute.xlu0 %1281
  %v1348 = vunpack.c.l.b16 %v1004
  %v1349 = vunpack.c.h.b16 %v1004
  %v1350 = vunpack.c.l.b16 %v1005
  %v1351 = vunpack.c.l.b16 %v1006
  %v1352 = vunpack.c.h.b16 %v1006
  %v1353 = vunpack.c.l.b16 %v1007
  %v1354 = vunpack.c.l.b16 %v1008
  %v1355 = vunpack.c.h.b16 %v1008
  %v1356 = vunpack.c.l.b16 %v1009
  %v1357 = vunpack.c.l.b16 %v1010
  %v1358 = vunpack.c.h.b16 %v1010
  %v1359 = vunpack.c.l.b16 %v1011
  %v1360 = vunpack.c.l.b16 %v1012
  %v1361 = vunpack.c.h.b16 %v1012
  %v1362 = vunpack.c.l.b16 %v1013
  %v1363 = vunpack.c.l.b16 %v1014
  %v1364 = vunpack.c.h.b16 %v1014
  %v1365 = vunpack.c.l.b16 %v1015
  %v1366 = vunpack.c.l.b16 %v1016
  %v1367 = vunpack.c.h.b16 %v1016
  %v1368 = vunpack.c.l.b16 %v1017
  %v1369 = vunpack.c.l.b16 %v1018
  %v1370 = vunpack.c.h.b16 %v1018
  %v1371 = vunpack.c.l.b16 %v1019
  %v1372 = vunpack.c.l.b16 %v1020
  %v1373 = vunpack.c.h.b16 %v1020
  %v1374 = vunpack.c.l.b16 %v1021
  %v1375 = vunpack.c.l.b16 %v1022
  %v1376 = vunpack.c.h.b16 %v1022
  %v1377 = vunpack.c.l.b16 %v1023
  %v1378 = vunpack.c.l.b16 %v1024
  %v1379 = vunpack.c.h.b16 %v1024
  %v1380 = vunpack.c.l.b16 %v1025
  %v1381 = vunpack.c.l.b16 %v1026
  %v1382 = vunpack.c.h.b16 %v1026
  %v1383 = vunpack.c.l.b16 %v1027
  %v1384 = vunpack.c.l.b16 %v1028
  %v1385 = vunpack.c.h.b16 %v1028
  %v1386 = vunpack.c.l.b16 %v1029
  %v1387 = vunpack.c.l.b16 %v1030
  %v1388 = vunpack.c.h.b16 %v1030
  %v1389 = vunpack.c.l.b16 %v1031
  %v1390 = vunpack.c.l.b16 %v1032
  %v1391 = vunpack.c.h.b16 %v1032
  %v1392 = vunpack.c.l.b16 %v1033
  %v1393 = vunpack.c.l.b16 %v1034
  %v1394 = vunpack.c.h.b16 %v1034
  %v1395 = vunpack.c.l.b16 %v1035
  %v1396 = vunpack.c.l.b16 %v1036
  %v1397 = vunpack.c.h.b16 %v1036
  %v1398 = vunpack.c.l.b16 %v1037
  %v1399 = vunpack.c.l.b16 %v1038
  %v1400 = vunpack.c.h.b16 %v1038
  %v1401 = vunpack.c.l.b16 %v1039
  %v1402 = vunpack.c.l.b16 %v1040
  %v1403 = vunpack.c.h.b16 %v1040
  %v1404 = vunpack.c.l.b16 %v1041
  %v1405 = vunpack.c.l.b16 %v1042
  %v1406 = vunpack.c.h.b16 %v1042
  %v1407 = vunpack.c.l.b16 %v1043
  %v1408 = vunpack.c.l.b16 %v1044
  %v1409 = vunpack.c.h.b16 %v1044
  %v1410 = vunpack.c.l.b16 %v1045
  %v1411 = vunpack.c.l.b16 %v1046
  %v1412 = vunpack.c.h.b16 %v1046
  %v1413 = vunpack.c.l.b16 %v1047
  %v1414 = vunpack.c.l.b16 %v1048
  %v1415 = vunpack.c.h.b16 %v1048
  %v1416 = vunpack.c.l.b16 %v1049
  %v1417 = vunpack.c.l.b16 %v1050
  %v1418 = vunpack.c.h.b16 %v1050
  %v1419 = vunpack.c.l.b16 %v1051
  %v1420 = vunpack.c.l.b16 %v1052
  %v1421 = vunpack.c.h.b16 %v1052
  %v1422 = vunpack.c.l.b16 %v1053
  %v1423 = vunpack.c.l.b16 %v1054
  %v1424 = vunpack.c.h.b16 %v1054
  %v1425 = vunpack.c.l.b16 %v1055
  %v1426 = vunpack.c.l.b16 %v1056
  %v1427 = vunpack.c.h.b16 %v1056
  %v1428 = vunpack.c.l.b16 %v1057
  %v1429 = vunpack.c.l.b16 %v1058
  %v1430 = vunpack.c.h.b16 %v1058
  %v1431 = vunpack.c.l.b16 %v1059
  %v1432 = vunpack.c.l.b16 %v1060
  %v1433 = vunpack.c.h.b16 %v1060
  %v1434 = vunpack.c.l.b16 %v1061
  %v1435 = vunpack.c.l.b16 %v1062
  %v1436 = vunpack.c.h.b16 %v1062
  %v1437 = vunpack.c.l.b16 %v1063
  %v1438 = vunpack.c.l.b16 %v1064
  %v1439 = vunpack.c.h.b16 %v1064
  %v1440 = vunpack.c.l.b16 %v1065
  %v1441 = vunpack.c.l.b16 %v1066
  %v1442 = vunpack.c.h.b16 %v1066
  %v1443 = vunpack.c.l.b16 %v1067
  %v1444 = vpack.c.b16 %v1351, %v1348
  %v1445 = vpack.c.b16 %v1352, %v1349
  %v1446 = vpack.c.b16 %v1353, %v1350
  %v1447 = vpack.c.b16 %v1357, %v1354
  %v1448 = vpack.c.b16 %v1358, %v1355
  %v1449 = vpack.c.b16 %v1359, %v1356
  %v1450 = vpack.c.b16 %v1363, %v1360
  %v1451 = vpack.c.b16 %v1364, %v1361
  %v1452 = vpack.c.b16 %v1365, %v1362
  %v1453 = vpack.c.b16 %v1369, %v1366
  %v1454 = vpack.c.b16 %v1370, %v1367
  %v1455 = vpack.c.b16 %v1371, %v1368
  %v1456 = vpack.c.b16 %v1375, %v1372
  %v1457 = vpack.c.b16 %v1376, %v1373
  %v1458 = vpack.c.b16 %v1377, %v1374
  %v1459 = vpack.c.b16 %v1381, %v1378
  %v1460 = vpack.c.b16 %v1382, %v1379
  %v1461 = vpack.c.b16 %v1383, %v1380
  %v1462 = vpack.c.b16 %v1387, %v1384
  %v1463 = vpack.c.b16 %v1388, %v1385
  %v1464 = vpack.c.b16 %v1389, %v1386
  %v1465 = vpack.c.b16 %v1393, %v1390
  %v1466 = vpack.c.b16 %v1394, %v1391
  %v1467 = vpack.c.b16 %v1395, %v1392
  %v1468 = vpack.c.b16 %v1399, %v1396
  %v1469 = vpack.c.b16 %v1400, %v1397
  %v1470 = vpack.c.b16 %v1401, %v1398
  %v1471 = vpack.c.b16 %v1405, %v1402
  %v1472 = vpack.c.b16 %v1406, %v1403
  %v1473 = vpack.c.b16 %v1407, %v1404
  %v1474 = vpack.c.b16 %v1411, %v1408
  %v1475 = vpack.c.b16 %v1412, %v1409
  %v1476 = vpack.c.b16 %v1413, %v1410
  %v1477 = vpack.c.b16 %v1417, %v1414
  %v1478 = vpack.c.b16 %v1418, %v1415
  %v1479 = vpack.c.b16 %v1419, %v1416
  %v1480 = vpack.c.b16 %v1423, %v1420
  %v1481 = vpack.c.b16 %v1424, %v1421
  %v1482 = vpack.c.b16 %v1425, %v1422
  %v1483 = vpack.c.b16 %v1429, %v1426
  %v1484 = vpack.c.b16 %v1430, %v1427
  %v1485 = vpack.c.b16 %v1431, %v1428
  %v1486 = vpack.c.b16 %v1435, %v1432
  %v1487 = vpack.c.b16 %v1436, %v1433
  %v1488 = vpack.c.b16 %v1437, %v1434
  %v1489 = vpack.c.b16 %v1441, %v1438
  %v1490 = vpack.c.b16 %v1442, %v1439
  %v1491 = vpack.c.b16 %v1443, %v1440
  %1540 = vmatprep.subr.bf16.mxu0 0
  %1541 = vmatpush1.bf16.msra.mxu0 %v1068
  %1542 = vmatprep.subr.bf16.mxu0 0
  %1543 = vmatpush1.bf16.msra.mxu0 %v1069
  %1544 = vmatprep.subr.bf16.mxu0 0
  %1545 = vmatpush1.bf16.msra.mxu0 %v1070
  %1546 = vmatprep.subr.bf16.mxu0 0
  %1547 = vmatpush1.bf16.msra.mxu0 %v1071
  %1548 = vmatprep.subr.bf16.mxu0 0
  %1549 = vmatpush1.bf16.msra.mxu0 %v1072
  %1550 = vmatprep.subr.bf16.mxu0 0
  %1551 = vmatpush1.bf16.msra.mxu0 %v1073
  %1552 = vmatprep.subr.bf16.mxu0 0
  %1553 = vmatpush1.bf16.msra.mxu0 %v1074
  %1554 = vmatprep.subr.bf16.mxu0 0
  %1555 = vmatpush1.bf16.msra.mxu0 %v1075
  %1556 = vmatprep.subr.bf16.mxu0 0
  %1557 = vmatpush1.bf16.msra.mxu0 %v1076
  %1558 = vmatprep.subr.bf16.mxu0 0
  %1559 = vmatpush1.bf16.msra.mxu0 %v1077
  %1560 = vmatprep.subr.bf16.mxu0 0
  %1561 = vmatpush1.bf16.msra.mxu0 %v1078
  %1562 = vmatprep.subr.bf16.mxu0 0
  %1563 = vmatpush1.bf16.msra.mxu0 %v1079
  %1564 = vmatprep.subr.bf16.mxu0 0
  %1565 = vmatpush1.bf16.msra.mxu0 %v1080
  %1566 = vmatprep.subr.bf16.mxu0 0
  %1567 = vmatpush1.bf16.msra.mxu0 %v1081
  %1568 = vmatprep.subr.bf16.mxu0 0
  %1569 = vmatpush1.bf16.msra.mxu0 %v1082
  %1570 = vmatprep.subr.bf16.mxu0 0
  %1571 = vmatpush1.bf16.msra.mxu0 %v1083
  %1572 = vmatprep.mubr.bf16.mxu0 %v1445
  %1573 = vmatmul.mubr.bf16.gmra.mrb[0].mxu0 %v1444
  %v1574 = vpop.f32.mrb[0].mxu0
  %v1575 = vadd.f32 %v1127, %v1574
  %v1576 = vpop.f32.mrb[0].mxu0
  %v1577 = vpop.f32.mrb[0].mxu0
  %v1578 = vadd.f32 %v1132, %v1577
  %v1579 = vpop.f32.mrb[0].mxu0
  %1580 = vmatprep.mubr.bf16.mxu0 %v1448
  %1581 = vmatmul.mubr.bf16.gmra.mrb[0].mxu0 %v1447
  %v1582 = vpop.f32.mrb[0].mxu0
  %v1583 = vadd.f32 %v1137, %v1582
  %v1584 = vpop.f32.mrb[0].mxu0
  %v1585 = vpop.f32.mrb[0].mxu0
  %v1586 = vadd.f32 %v1142, %v1585
  %v1587 = vpop.f32.mrb[0].mxu0
  %1588 = vmatprep.mubr.bf16.mxu0 %v1451
  %1589 = vmatmul.mubr.bf16.gmra.mrb[0].mxu0 %v1450
  %v1590 = vpop.f32.mrb[0].mxu0
  %v1591 = vadd.f32 %v1147, %v1590
  %v1592 = vpop.f32.mrb[0].mxu0
  %v1593 = vpop.f32.mrb[0].mxu0
  %v1594 = vadd.f32 %v1152, %v1593
  %v1595 = vpop.f32.mrb[0].mxu0
  %1596 = vmatprep.mubr.bf16.mxu0 %v1454
  %1597 = vmatmul.mubr.bf16.gmra.mrb[0].mxu0 %v1453
  %v1598 = vpop.f32.mrb[0].mxu0
  %v1599 = vadd.f32 %v1157, %v1598
  %v1600 = vpop.f32.mrb[0].mxu0
  %v1601 = vpop.f32.mrb[0].mxu0
  %v1602 = vadd.f32 %v1162, %v1601
  %v1603 = vpop.f32.mrb[0].mxu0
  %1604 = vmatprep.mubr.bf16.mxu0 %v1457
  %1605 = vmatmul.mubr.bf16.gmra.mrb[0].mxu0 %v1456
  %v1606 = vpop.f32.mrb[0].mxu0
  %v1607 = vadd.f32 %v1167, %v1606
  %v1608 = vpop.f32.mrb[0].mxu0
  %v1609 = vpop.f32.mrb[0].mxu0
  %v1610 = vadd.f32 %v1172, %v1609
  %v1611 = vpop.f32.mrb[0].mxu0
  %1612 = vmatprep.mubr.bf16.mxu0 %v1460
  %1613 = vmatmul.mubr.bf16.gmra.mrb[0].mxu0 %v1459
  %v1614 = vpop.f32.mrb[0].mxu0
  %v1615 = vadd.f32 %v1177, %v1614
  %v1616 = vpop.f32.mrb[0].mxu0
  %v1617 = vpop.f32.mrb[0].mxu0
  %v1618 = vadd.f32 %v1182, %v1617
  %v1619 = vpop.f32.mrb[0].mxu0
  %1620 = vmatprep.mubr.bf16.mxu0 %v1463
  %1621 = vmatmul.mubr.bf16.gmra.mrb[0].mxu0 %v1462
  %v1622 = vpop.f32.mrb[0].mxu0
  %v1623 = vadd.f32 %v1187, %v1622
  %v1624 = vpop.f32.mrb[0].mxu0
  %v1625 = vpop.f32.mrb[0].mxu0
  %v1626 = vadd.f32 %v1192, %v1625
  %v1627 = vpop.f32.mrb[0].mxu0
  %1628 = vmatprep.mubr.bf16.mxu0 %v1466
  %1629 = vmatmul.mubr.bf16.gmra.mrb[0].mxu0 %v1465
  %v1630 = vpop.f32.mrb[0].mxu0
  %v1631 = vadd.f32 %v1197, %v1630
  %v1632 = vpop.f32.mrb[0].mxu0
  %v1633 = vpop.f32.mrb[0].mxu0
  %v1634 = vadd.f32 %v1202, %v1633
  %v1635 = vpop.f32.mrb[0].mxu0
  %1636 = vmatprep.mubr.bf16.mxu0 %v1469
  %1637 = vmatmul.mubr.bf16.gmra.mrb[0].mxu0 %v1468
  %v1638 = vpop.f32.mrb[0].mxu0
  %v1639 = vadd.f32 %v1207, %v1638
  %v1640 = vpop.f32.mrb[0].mxu0
  %v1641 = vpop.f32.mrb[0].mxu0
  %v1642 = vadd.f32 %v1212, %v1641
  %v1643 = vpop.f32.mrb[0].mxu0
  %1644 = vmatprep.mubr.bf16.mxu0 %v1472
  %1645 = vmatmul.mubr.bf16.gmra.mrb[0].mxu0 %v1471
  %v1646 = vpop.f32.mrb[0].mxu0
  %v1647 = vadd.f32 %v1217, %v1646
  %v1648 = vpop.f32.mrb[0].mxu0
  %v1649 = vpop.f32.mrb[0].mxu0
  %v1650 = vadd.f32 %v1222, %v1649
  %v1651 = vpop.f32.mrb[0].mxu0
  %1652 = vmatprep.mubr.bf16.mxu0 %v1475
  %1653 = vmatmul.mubr.bf16.gmra.mrb[0].mxu0 %v1474
  %v1654 = vpop.f32.mrb[0].mxu0
  %v1655 = vadd.f32 %v1227, %v1654
  %v1656 = vpop.f32.mrb[0].mxu0
  %v1657 = vpop.f32.mrb[0].mxu0
  %v1658 = vadd.f32 %v1232, %v1657
  %v1659 = vpop.f32.mrb[0].mxu0
  %1660 = vmatprep.mubr.bf16.mxu0 %v1478
  %1661 = vmatmul.mubr.bf16.gmra.mrb[0].mxu0 %v1477
  %v1662 = vpop.f32.mrb[0].mxu0
  %v1663 = vadd.f32 %v1237, %v1662
  %v1664 = vpop.f32.mrb[0].mxu0
  %v1665 = vpop.f32.mrb[0].mxu0
  %v1666 = vadd.f32 %v1242, %v1665
  %v1667 = vpop.f32.mrb[0].mxu0
  %1668 = vmatprep.mubr.bf16.mxu0 %v1481
  %1669 = vmatmul.mubr.bf16.gmra.mrb[0].mxu0 %v1480
  %v1670 = vpop.f32.mrb[0].mxu0
  %v1671 = vadd.f32 %v1247, %v1670
  %v1672 = vpop.f32.mrb[0].mxu0
  %v1673 = vpop.f32.mrb[0].mxu0
  %v1674 = vadd.f32 %v1252, %v1673
  %v1675 = vpop.f32.mrb[0].mxu0
  %1676 = vmatprep.mubr.bf16.mxu0 %v1484
  %1677 = vmatmul.mubr.bf16.gmra.mrb[0].mxu0 %v1483
  %v1678 = vpop.f32.mrb[0].mxu0
  %v1679 = vadd.f32 %v1257, %v1678
  %v1680 = vpop.f32.mrb[0].mxu0
  %v1681 = vpop.f32.mrb[0].mxu0
  %v1682 = vadd.f32 %v1262, %v1681
  %v1683 = vpop.f32.mrb[0].mxu0
  %1684 = vmatprep.mubr.bf16.mxu0 %v1487
  %1685 = vmatmul.mubr.bf16.gmra.mrb[0].mxu0 %v1486
  %v1686 = vpop.f32.mrb[0].mxu0
  %v1687 = vadd.f32 %v1267, %v1686
  %v1688 = vpop.f32.mrb[0].mxu0
  %v1689 = vpop.f32.mrb[0].mxu0
  %v1690 = vadd.f32 %v1272, %v1689
  %v1691 = vpop.f32.mrb[0].mxu0
  %1692 = vmatprep.mubr.bf16.mxu0 %v1490
  %1693 = vmatmul.mubr.bf16.gmra.mrb[0].mxu0 %v1489
  %v1694 = vpop.f32.mrb[0].mxu0
  %v1695 = vadd.f32 %v1277, %v1694
  %v1696 = vpop.f32.mrb[0].mxu0
  %v1697 = vpop.f32.mrb[0].mxu0
  %v1698 = vadd.f32 %v1282, %v1697
  %v1699 = vpop.f32.mrb[0].mxu0
  %1700 = vdwg.mxu0
  %1701 = vmatprep.subr.bf16.mxu0 0
  %1702 = vmatpush1.bf16.msra.mxu0 %v1084
  %1703 = vmatprep.subr.bf16.mxu0 0
  %1704 = vmatpush1.bf16.msra.mxu0 %v1085
  %1705 = vmatprep.subr.bf16.mxu0 0
  %1706 = vmatpush1.bf16.msra.mxu0 %v1086
  %1707 = vmatprep.subr.bf16.mxu0 0
  %1708 = vmatpush1.bf16.msra.mxu0 %v1087
  %1709 = vmatprep.subr.bf16.mxu0 0
  %1710 = vmatpush1.bf16.msra.mxu0 %v1088
  %1711 = vmatprep.subr.bf16.mxu0 0
  %1712 = vmatpush1.bf16.msra.mxu0 %v1089
  %1713 = vmatprep.subr.bf16.mxu0 0
  %1714 = vmatpush1.bf16.msra.mxu0 %v1090
  %1715 = vmatprep.subr.bf16.mxu0 0
  %1716 = vmatpush1.bf16.msra.mxu0 %v1091
  %1717 = vmatprep.subr.bf16.mxu0 0
  %1718 = vmatpush1.bf16.msra.mxu0 0
  %1719 = vmatprep.subr.bf16.mxu0 0
  %1720 = vmatpush1.bf16.msra.mxu0 0
  %1721 = vmatprep.subr.bf16.mxu0 0
  %1722 = vmatpush1.bf16.msra.mxu0 0
  %1723 = vmatprep.subr.bf16.mxu0 0
  %1724 = vmatpush1.bf16.msra.mxu0 0
  %1725 = vmatprep.subr.bf16.mxu0 0
  %1726 = vmatpush1.bf16.msra.mxu0 0
  %1727 = vmatprep.subr.bf16.mxu0 0
  %1728 = vmatpush1.bf16.msra.mxu0 0
  %1729 = vmatprep.subr.bf16.mxu0 0
  %1730 = vmatpush1.bf16.msra.mxu0 0
  %1731 = vmatprep.subr.bf16.mxu0 0
  %1732 = vmatpush1.bf16.msra.mxu0 0
  %1733 = vmatprep.mubr.bf16.mxu0 0
  %1734 = vmatmul.mubr.bf16.gmra.mrb[0].mxu0 %v1446
  %v1735 = vpop.f32.mrb[0].mxu0
  %v1736 = vadd.f32 %v1575, %v1735
  %v1737 = vpop.f32.mrb[0].mxu0
  %v1738 = vpop.f32.mrb[0].mxu0
  %v1739 = vadd.f32 %v1578, %v1738
  %v1740 = vpop.f32.mrb[0].mxu0
  %1741 = vmatprep.mubr.bf16.mxu0 0
  %1742 = vmatmul.mubr.bf16.gmra.mrb[0].mxu0 %v1449
  %v1743 = vpop.f32.mrb[0].mxu0
  %v1744 = vadd.f32 %v1583, %v1743
  %v1745 = vpop.f32.mrb[0].mxu0
  %v1746 = vpop.f32.mrb[0].mxu0
  %v1747 = vadd.f32 %v1586, %v1746
  %v1748 = vpop.f32.mrb[0].mxu0
  %1749 = vmatprep.mubr.bf16.mxu0 0
  %1750 = vmatmul.mubr.bf16.gmra.mrb[0].mxu0 %v1452
  %v1751 = vpop.f32.mrb[0].mxu0
  %v1752 = vadd.f32 %v1591, %v1751
  %v1753 = vpop.f32.mrb[0].mxu0
  %v1754 = vpop.f32.mrb[0].mxu0
  %v1755 = vadd.f32 %v1594, %v1754
  %v1756 = vpop.f32.mrb[0].mxu0
  %1757 = vmatprep.mubr.bf16.mxu0 0
  %1758 = vmatmul.mubr.bf16.gmra.mrb[0].mxu0 %v1455
  %v1759 = vpop.f32.mrb[0].mxu0
  %v1760 = vadd.f32 %v1599, %v1759
  %v1761 = vpop.f32.mrb[0].mxu0
  %v1762 = vpop.f32.mrb[0].mxu0
  %v1763 = vadd.f32 %v1602, %v1762
  %v1764 = vpop.f32.mrb[0].mxu0
  %1765 = vmatprep.mubr.bf16.mxu0 0
  %1766 = vmatmul.mubr.bf16.gmra.mrb[0].mxu0 %v1458
  %v1767 = vpop.f32.mrb[0].mxu0
  %v1768 = vadd.f32 %v1607, %v1767
  %v1769 = vpop.f32.mrb[0].mxu0
  %v1770 = vpop.f32.mrb[0].mxu0
  %v1771 = vadd.f32 %v1610, %v1770
  %v1772 = vpop.f32.mrb[0].mxu0
  %1773 = vmatprep.mubr.bf16.mxu0 0
  %1774 = vmatmul.mubr.bf16.gmra.mrb[0].mxu0 %v1461
  %v1775 = vpop.f32.mrb[0].mxu0
  %v1776 = vadd.f32 %v1615, %v1775
  %v1777 = vpop.f32.mrb[0].mxu0
  %v1778 = vpop.f32.mrb[0].mxu0
  %v1779 = vadd.f32 %v1618, %v1778
  %v1780 = vpop.f32.mrb[0].mxu0
  %1781 = vmatprep.mubr.bf16.mxu0 0
  %1782 = vmatmul.mubr.bf16.gmra.mrb[0].mxu0 %v1464
  %v1783 = vpop.f32.mrb[0].mxu0
  %v1784 = vadd.f32 %v1623, %v1783
  %v1785 = vpop.f32.mrb[0].mxu0
  %v1786 = vpop.f32.mrb[0].mxu0
  %v1787 = vadd.f32 %v1626, %v1786
  %v1788 = vpop.f32.mrb[0].mxu0
  %1789 = vmatprep.mubr.bf16.mxu0 0
  %1790 = vmatmul.mubr.bf16.gmra.mrb[0].mxu0 %v1467
  %v1791 = vpop.f32.mrb[0].mxu0
  %v1792 = vadd.f32 %v1631, %v1791
  %v1793 = vpop.f32.mrb[0].mxu0
  %v1794 = vpop.f32.mrb[0].mxu0
  %v1795 = vadd.f32 %v1634, %v1794
  %v1796 = vpop.f32.mrb[0].mxu0
  %1797 = vmatprep.mubr.bf16.mxu0 0
  %1798 = vmatmul.mubr.bf16.gmra.mrb[0].mxu0 %v1470
  %v1799 = vpop.f32.mrb[0].mxu0
  %v1800 = vadd.f32 %v1639, %v1799
  %v1801 = vpop.f32.mrb[0].mxu0
  %v1802 = vpop.f32.mrb[0].mxu0
  %v1803 = vadd.f32 %v1642, %v1802
  %v1804 = vpop.f32.mrb[0].mxu0
  %1805 = vmatprep.mubr.bf16.mxu0 0
  %1806 = vmatmul.mubr.bf16.gmra.mrb[0].mxu0 %v1473
  %v1807 = vpop.f32.mrb[0].mxu0
  %v1808 = vadd.f32 %v1647, %v1807
  %v1809 = vpop.f32.mrb[0].mxu0
  %v1810 = vpop.f32.mrb[0].mxu0
  %v1811 = vadd.f32 %v1650, %v1810
  %v1812 = vpop.f32.mrb[0].mxu0
  %1813 = vmatprep.mubr.bf16.mxu0 0
  %1814 = vmatmul.mubr.bf16.gmra.mrb[0].mxu0 %v1476
  %v1815 = vpop.f32.mrb[0].mxu0
  %v1816 = vadd.f32 %v1655, %v1815
  %v1817 = vpop.f32.mrb[0].mxu0
  %v1818 = vpop.f32.mrb[0].mxu0
  %v1819 = vadd.f32 %v1658, %v1818
  %v1820 = vpop.f32.mrb[0].mxu0
  %1821 = vmatprep.mubr.bf16.mxu0 0
  %1822 = vmatmul.mubr.bf16.gmra.mrb[0].mxu0 %v1479
  %v1823 = vpop.f32.mrb[0].mxu0
  %v1824 = vadd.f32 %v1663, %v1823
  %v1825 = vpop.f32.mrb[0].mxu0
  %v1826 = vpop.f32.mrb[0].mxu0
  %v1827 = vadd.f32 %v1666, %v1826
  %v1828 = vpop.f32.mrb[0].mxu0
  %1829 = vmatprep.mubr.bf16.mxu0 0
  %1830 = vmatmul.mubr.bf16.gmra.mrb[0].mxu0 %v1482
  %v1831 = vpop.f32.mrb[0].mxu0
  %v1832 = vadd.f32 %v1671, %v1831
  %v1833 = vpop.f32.mrb[0].mxu0
  %v1834 = vpop.f32.mrb[0].mxu0
  %v1835 = vadd.f32 %v1674, %v1834
  %v1836 = vpop.f32.mrb[0].mxu0
  %1837 = vmatprep.mubr.bf16.mxu0 0
  %1838 = vmatmul.mubr.bf16.gmra.mrb[0].mxu0 %v1485
  %v1839 = vpop.f32.mrb[0].mxu0
  %v1840 = vadd.f32 %v1679, %v1839
  %v1841 = vpop.f32.mrb[0].mxu0
  %v1842 = vpop.f32.mrb[0].mxu0
  %v1843 = vadd.f32 %v1682, %v1842
  %v1844 = vpop.f32.mrb[0].mxu0
  %1845 = vmatprep.mubr.bf16.mxu0 0
  %1846 = vmatmul.mubr.bf16.gmra.mrb[0].mxu0 %v1488
  %v1847 = vpop.f32.mrb[0].mxu0
  %v1848 = vadd.f32 %v1687, %v1847
  %v1849 = vpop.f32.mrb[0].mxu0
  %v1850 = vpop.f32.mrb[0].mxu0
  %v1851 = vadd.f32 %v1690, %v1850
  %v1852 = vpop.f32.mrb[0].mxu0
  %1853 = vmatprep.mubr.bf16.mxu0 0
  %1854 = vmatmul.mubr.bf16.gmra.mrb[0].mxu0 %v1491
  %v1855 = vpop.f32.mrb[0].mxu0
  %v1856 = vadd.f32 %v1695, %v1855
  %v1857 = vpop.f32.mrb[0].mxu0
  %v1858 = vpop.f32.mrb[0].mxu0
  %v1859 = vadd.f32 %v1698, %v1858
  %v1860 = vpop.f32.mrb[0].mxu0
  %1861 = vdwg.mxu0
  %v1862 = vmax.f32 %v1736, 0.0
  %v1863 = vmax.f32 %v1739, 0.0
  %v1864 = vmax.f32 %v1744, 0.0
  %v1865 = vmax.f32 %v1747, 0.0
  %v1866 = vmax.f32 %v1752, 0.0
  %v1867 = vmax.f32 %v1755, 0.0
  %v1868 = vmax.f32 %v1760, 0.0
  %v1869 = vmax.f32 %v1763, 0.0
  %v1870 = vmax.f32 %v1768, 0.0
  %v1871 = vmax.f32 %v1771, 0.0
  %v1872 = vmax.f32 %v1776, 0.0
  %v1873 = vmax.f32 %v1779, 0.0
  %v1874 = vmax.f32 %v1784, 0.0
  %v1875 = vmax.f32 %v1787, 0.0
  %v1876 = vmax.f32 %v1792, 0.0
  %v1877 = vmax.f32 %v1795, 0.0
  %v1878 = vmax.f32 %v1800, 0.0
  %v1879 = vmax.f32 %v1803, 0.0
  %v1880 = vmax.f32 %v1808, 0.0
  %v1881 = vmax.f32 %v1811, 0.0
  %v1882 = vmax.f32 %v1816, 0.0
  %v1883 = vmax.f32 %v1819, 0.0
  %v1884 = vmax.f32 %v1824, 0.0
  %v1885 = vmax.f32 %v1827, 0.0
  %v1886 = vmax.f32 %v1832, 0.0
  %v1887 = vmax.f32 %v1835, 0.0
  %v1888 = vmax.f32 %v1840, 0.0
  %v1889 = vmax.f32 %v1843, 0.0
  %v1890 = vmax.f32 %v1848, 0.0
  %v1891 = vmax.f32 %v1851, 0.0
  %v1892 = vmax.f32 %v1856, 0.0
  %v1893 = vmax.f32 %v1859, 0.0
  %v1894 = vld [vmem:[%s5] sm:$0xff]
  %v1895 = vld [vmem:[%s5 + $0x8] sm:$0xff]
  %v1896 = vld [vmem:[%s5 + $0x10] sm:$0xff]
  %v1897 = vld [vmem:[%s5 + $0x18] sm:$0xff]
  %v1898 = vld [vmem:[%s5 + $0x20] sm:$0xff]
  %v1899 = vld [vmem:[%s5 + $0x28] sm:$0xff]
  %v1900 = vld [vmem:[%s5 + $0x30] sm:$0xff]
  %v1901 = vld [vmem:[%s5 + $0x38] sm:$0xff]
  %v1902 = vld [vmem:[%s5 + $0x40] sm:$0xff]
  %v1903 = vld [vmem:[%s5 + $0x48] sm:$0xff]
  %v1904 = vld [vmem:[%s5 + $0x50] sm:$0xff]
  %v1905 = vld [vmem:[%s5 + $0x58] sm:$0xff]
  %v1906 = vld [vmem:[%s5 + $0x60] sm:$0xff]
  %v1907 = vld [vmem:[%s5 + $0x68] sm:$0xff]
  %v1908 = vld [vmem:[%s5 + $0x70] sm:$0xff]
  %v1909 = vld [vmem:[%s5 + $0x78] sm:$0xff]
  %v1910 = vpack.c.bf16 %v1863, %v1862
  %v1911 = vpack.c.bf16 %v1865, %v1864
  %v1912 = vpack.c.bf16 %v1867, %v1866
  %v1913 = vpack.c.bf16 %v1869, %v1868
  %v1914 = vpack.c.bf16 %v1871, %v1870
  %v1915 = vpack.c.bf16 %v1873, %v1872
  %v1916 = vpack.c.bf16 %v1875, %v1874
  %v1917 = vpack.c.bf16 %v1877, %v1876
  %v1918 = vpack.c.bf16 %v1879, %v1878
  %v1919 = vpack.c.bf16 %v1881, %v1880
  %v1920 = vpack.c.bf16 %v1883, %v1882
  %v1921 = vpack.c.bf16 %v1885, %v1884
  %v1922 = vpack.c.bf16 %v1887, %v1886
  %v1923 = vpack.c.bf16 %v1889, %v1888
  %v1924 = vpack.c.bf16 %v1891, %v1890
  %v1925 = vpack.c.bf16 %v1893, %v1892
  %v1926 = vld [vmem:[%s6] sm:$0xff]
  %v1927 = vld [vmem:[%s6 + $0x8] sm:$0xff]
  %v1928 = vld [vmem:[%s6 + $0x10] sm:$0xff]
  %v1929 = vld [vmem:[%s6 + $0x18] sm:$0xff]
  %v1930 = vld [vmem:[%s6 + $0x20] sm:$0xff]
  %v1931 = vld [vmem:[%s6 + $0x28] sm:$0xff]
  %v1932 = vld [vmem:[%s6 + $0x30] sm:$0xff]
  %v1933 = vld [vmem:[%s6 + $0x38] sm:$0xff]
  %v1934 = vld [vmem:[%s6 + $0x40] sm:$0xff]
  %v1935 = vld [vmem:[%s6 + $0x48] sm:$0xff]
  %v1936 = vld [vmem:[%s6 + $0x50] sm:$0xff]
  %v1937 = vld [vmem:[%s6 + $0x58] sm:$0xff]
  %v1938 = vld [vmem:[%s6 + $0x60] sm:$0xff]
  %v1939 = vld [vmem:[%s6 + $0x68] sm:$0xff]
  %v1940 = vld [vmem:[%s6 + $0x70] sm:$0xff]
  %v1941 = vld [vmem:[%s6 + $0x78] sm:$0xff]
  %1943 = vset.pattern.permute.xlu0 0
  %1944 = vperm.xlu0 %1943, %v1926
  %v1945 = vpop.permute.xlu0 %1944
  %1948 = vset.pattern.permute.xlu0 0
  %1949 = vperm.xlu0 %1948, %v1927
  %v1950 = vpop.permute.xlu0 %1949
  %1952 = vset.pattern.permute.xlu0 0
  %1953 = vperm.xlu0 %1952, %v1928
  %v1954 = vpop.permute.xlu0 %1953
  %1956 = vset.pattern.permute.xlu0 0
  %1957 = vperm.xlu0 %1956, %v1929
  %v1958 = vpop.permute.xlu0 %1957
  %1960 = vset.pattern.permute.xlu0 0
  %1961 = vperm.xlu0 %1960, %v1930
  %v1962 = vpop.permute.xlu0 %1961
  %1964 = vset.pattern.permute.xlu0 0
  %1965 = vperm.xlu0 %1964, %v1931
  %v1966 = vpop.permute.xlu0 %1965
  %1968 = vset.pattern.permute.xlu0 0
  %1969 = vperm.xlu0 %1968, %v1932
  %v1970 = vpop.permute.xlu0 %1969
  %1972 = vset.pattern.permute.xlu0 0
  %1973 = vperm.xlu0 %1972, %v1933
  %v1974 = vpop.permute.xlu0 %1973
  %1976 = vset.pattern.permute.xlu0 0
  %1977 = vperm.xlu0 %1976, %v1934
  %v1978 = vpop.permute.xlu0 %1977
  %1980 = vset.pattern.permute.xlu0 0
  %1981 = vperm.xlu0 %1980, %v1935
  %v1982 = vpop.permute.xlu0 %1981
  %1984 = vset.pattern.permute.xlu0 0
  %1985 = vperm.xlu0 %1984, %v1936
  %v1986 = vpop.permute.xlu0 %1985
  %1988 = vset.pattern.permute.xlu0 0
  %1989 = vperm.xlu0 %1988, %v1937
  %v1990 = vpop.permute.xlu0 %1989
  %1992 = vset.pattern.permute.xlu0 0
  %1993 = vperm.xlu0 %1992, %v1938
  %v1994 = vpop.permute.xlu0 %1993
  %1996 = vset.pattern.permute.xlu0 0
  %1997 = vperm.xlu0 %1996, %v1939
  %v1998 = vpop.permute.xlu0 %1997
  %2000 = vset.pattern.permute.xlu0 0
  %2001 = vperm.xlu0 %2000, %v1940
  %v2002 = vpop.permute.xlu0 %2001
  %2004 = vset.pattern.permute.xlu0 0
  %2005 = vperm.xlu0 %2004, %v1941
  %v2006 = vpop.permute.xlu0 %2005
  %v2023 = vunpack.c.l.b16 %v1894
  %v2024 = vunpack.c.h.b16 %v1894
  %v2025 = vunpack.c.l.b16 %v1895
  %v2026 = vunpack.c.h.b16 %v1895
  %v2027 = vunpack.c.l.b16 %v1896
  %v2028 = vunpack.c.h.b16 %v1896
  %v2029 = vunpack.c.l.b16 %v1897
  %v2030 = vunpack.c.h.b16 %v1897
  %v2031 = vunpack.c.l.b16 %v1898
  %v2032 = vunpack.c.h.b16 %v1898
  %v2033 = vunpack.c.l.b16 %v1899
  %v2034 = vunpack.c.h.b16 %v1899
  %v2035 = vunpack.c.l.b16 %v1900
  %v2036 = vunpack.c.h.b16 %v1900
  %v2037 = vunpack.c.l.b16 %v1901
  %v2038 = vunpack.c.h.b16 %v1901
  %v2039 = vunpack.c.l.b16 %v1902
  %v2040 = vunpack.c.h.b16 %v1902
  %v2041 = vunpack.c.l.b16 %v1903
  %v2042 = vunpack.c.h.b16 %v1903
  %v2043 = vunpack.c.l.b16 %v1904
  %v2044 = vunpack.c.h.b16 %v1904
  %v2045 = vunpack.c.l.b16 %v1905
  %v2046 = vunpack.c.h.b16 %v1905
  %v2047 = vunpack.c.l.b16 %v1906
  %v2048 = vunpack.c.h.b16 %v1906
  %v2049 = vunpack.c.l.b16 %v1907
  %v2050 = vunpack.c.h.b16 %v1907
  %v2051 = vunpack.c.l.b16 %v1908
  %v2052 = vunpack.c.h.b16 %v1908
  %v2053 = vunpack.c.l.b16 %v1909
  %v2054 = vunpack.c.h.b16 %v1909
  %v2055 = vpack.c.b16 %v2025, %v2023
  %v2056 = vpack.c.b16 %v2026, %v2024
  %v2057 = vpack.c.b16 %v2029, %v2027
  %v2058 = vpack.c.b16 %v2030, %v2028
  %v2059 = vpack.c.b16 %v2033, %v2031
  %v2060 = vpack.c.b16 %v2034, %v2032
  %v2061 = vpack.c.b16 %v2037, %v2035
  %v2062 = vpack.c.b16 %v2038, %v2036
  %v2063 = vpack.c.b16 %v2041, %v2039
  %v2064 = vpack.c.b16 %v2042, %v2040
  %v2065 = vpack.c.b16 %v2045, %v2043
  %v2066 = vpack.c.b16 %v2046, %v2044
  %v2067 = vpack.c.b16 %v2049, %v2047
  %v2068 = vpack.c.b16 %v2050, %v2048
  %v2069 = vpack.c.b16 %v2053, %v2051
  %v2070 = vpack.c.b16 %v2054, %v2052
  %2087 = vmatprep.subr.bf16.mxu0 0
  %2088 = vmatpush1.bf16.msra.mxu0 %v1910
  %2089 = vmatprep.subr.bf16.mxu0 0
  %2090 = vmatpush1.bf16.msra.mxu0 %v1911
  %2091 = vmatprep.subr.bf16.mxu0 0
  %2092 = vmatpush1.bf16.msra.mxu0 %v1912
  %2093 = vmatprep.subr.bf16.mxu0 0
  %2094 = vmatpush1.bf16.msra.mxu0 %v1913
  %2095 = vmatprep.subr.bf16.mxu0 0
  %2096 = vmatpush1.bf16.msra.mxu0 %v1914
  %2097 = vmatprep.subr.bf16.mxu0 0
  %2098 = vmatpush1.bf16.msra.mxu0 %v1915
  %2099 = vmatprep.subr.bf16.mxu0 0
  %2100 = vmatpush1.bf16.msra.mxu0 %v1916
  %2101 = vmatprep.subr.bf16.mxu0 0
  %2102 = vmatpush1.bf16.msra.mxu0 %v1917
  %2103 = vmatprep.subr.bf16.mxu0 0
  %2104 = vmatpush1.bf16.msra.mxu0 %v1918
  %2105 = vmatprep.subr.bf16.mxu0 0
  %2106 = vmatpush1.bf16.msra.mxu0 %v1919
  %2107 = vmatprep.subr.bf16.mxu0 0
  %2108 = vmatpush1.bf16.msra.mxu0 %v1920
  %2109 = vmatprep.subr.bf16.mxu0 0
  %2110 = vmatpush1.bf16.msra.mxu0 %v1921
  %2111 = vmatprep.subr.bf16.mxu0 0
  %2112 = vmatpush1.bf16.msra.mxu0 %v1922
  %2113 = vmatprep.subr.bf16.mxu0 0
  %2114 = vmatpush1.bf16.msra.mxu0 %v1923
  %2115 = vmatprep.subr.bf16.mxu0 0
  %2116 = vmatpush1.bf16.msra.mxu0 %v1924
  %2117 = vmatprep.subr.bf16.mxu0 0
  %2118 = vmatpush1.bf16.msra.mxu0 %v1925
  %2119 = vmatprep.mubr.bf16.mxu0 %v2056
  %2120 = vmatmul.mubr.bf16.gmra.mrb[0].mxu0 %v2055
  %v2121 = vpop.f32.mrb[0].mxu0
  %v2122 = vadd.f32 %v1945, %v2121
  %v2123 = vpop.f32.mrb[0].mxu0
  %v2124 = vpop.f32.mrb[0].mxu0
  %v2125 = vpop.f32.mrb[0].mxu0
  %2126 = vmatprep.mubr.bf16.mxu0 %v2058
  %2127 = vmatmul.mubr.bf16.gmra.mrb[0].mxu0 %v2057
  %v2128 = vpop.f32.mrb[0].mxu0
  %v2129 = vpop.f32.mrb[0].mxu0
  %v2130 = vpop.f32.mrb[0].mxu0
  %v2131 = vpop.f32.mrb[0].mxu0
  %2132 = vmatprep.mubr.bf16.mxu0 %v2060
  %2133 = vmatmul.mubr.bf16.gmra.mrb[0].mxu0 %v2059
  %v2134 = vpop.f32.mrb[0].mxu0
  %v2135 = vpop.f32.mrb[0].mxu0
  %v2136 = vpop.f32.mrb[0].mxu0
  %v2137 = vpop.f32.mrb[0].mxu0
  %2138 = vmatprep.mubr.bf16.mxu0 %v2062
  %2139 = vmatmul.mubr.bf16.gmra.mrb[0].mxu0 %v2061
  %v2140 = vpop.f32.mrb[0].mxu0
  %v2141 = vpop.f32.mrb[0].mxu0
  %v2142 = vpop.f32.mrb[0].mxu0
  %v2143 = vpop.f32.mrb[0].mxu0
  %2144 = vmatprep.mubr.bf16.mxu0 %v2064
  %2145 = vmatmul.mubr.bf16.gmra.mrb[0].mxu0 %v2063
  %v2146 = vpop.f32.mrb[0].mxu0
  %v2147 = vpop.f32.mrb[0].mxu0
  %v2148 = vpop.f32.mrb[0].mxu0
  %v2149 = vpop.f32.mrb[0].mxu0
  %2150 = vmatprep.mubr.bf16.mxu0 %v2066
  %2151 = vmatmul.mubr.bf16.gmra.mrb[0].mxu0 %v2065
  %v2152 = vpop.f32.mrb[0].mxu0
  %v2153 = vpop.f32.mrb[0].mxu0
  %v2154 = vpop.f32.mrb[0].mxu0
  %v2155 = vpop.f32.mrb[0].mxu0
  %2156 = vmatprep.mubr.bf16.mxu0 %v2068
  %2157 = vmatmul.mubr.bf16.gmra.mrb[0].mxu0 %v2067
  %v2158 = vpop.f32.mrb[0].mxu0
  %v2159 = vpop.f32.mrb[0].mxu0
  %v2160 = vpop.f32.mrb[0].mxu0
  %v2161 = vpop.f32.mrb[0].mxu0
  %2162 = vmatprep.mubr.bf16.mxu0 %v2070
  %2163 = vmatmul.mubr.bf16.gmra.mrb[0].mxu0 %v2069
  %v2164 = vpop.f32.mrb[0].mxu0
  %v2165 = vpop.f32.mrb[0].mxu0
  %v2166 = vpop.f32.mrb[0].mxu0
  %v2167 = vpop.f32.mrb[0].mxu0
  %2168 = vdwg.mxu0
  %v2169 = vmax.f32 %v2122, 0.0
  %2170 = vst [vmem:[%s7] sm:$0x1] %v2169
  // Predicated region
  $region30: #{simple_ann_forward.1} parent=0 // pred_check
    _
  $region31: #{simple_ann_forward.1} parent=0 // pred_check_branch
    %2172 = sbr.rel (0) target = $region33
  $region32: #{simple_ann_forward.1} parent=0 // pred_region
    _
  $region33: #{simple_ann_forward.1} parent=0 // pred_fallthru
    _
  // Predicated region
  $region34: #{simple_ann_forward.1} parent=0 // pred_check
    _
  $region35: #{simple_ann_forward.1} parent=0 // pred_check_branch
    %2174 = sbr.rel (0) target = $region37
  $region36: #{simple_ann_forward.1} parent=0 // pred_region
    _
  $region37: #{simple_ann_forward.1} parent=0 // pred_fallthru
    _

</llo_original>
